<compile_context>
chip_gen: v7x
topology: tpu7x:2x2x1
jax: 0.10.0
libtpu: 0.0.40
codegen_flags: <defaults>
</compile_context>

<pallas_src>
import functools
import math

import jax
import jax.numpy as jnp
from jax.experimental import pallas as pl
from jax.experimental.pallas import tpu as pltpu


def _round_up(x, m):
    return (x + m - 1) // m * m


# ----------------------------------------------------------------------------
# Fused Pallas kernel: conv3x3 + bias + ReLU + global-avg-pool + FC head
# ----------------------------------------------------------------------------
def _fused_conv_gap_fc_kernel(x_ref, w_ref, cb_ref, mask_ref, fcw_ref, fcb_ref,
                              o_ref, gap_ref, *, Wp, inv_hw):
    """One grid step = (batch b, spatial row-tile t).

    x_ref    : ((TH+3)*Wp, Cin)  bf16  halo'd, flattened padded-input row tile
    w_ref    : (9, Cin, CoutP)   bf16  conv taps, Cout zero-padded to 128
    cb_ref   : (1, CoutP)        f32   conv bias (zero in padded cols)
    mask_ref : (TH*Wp, 1)        f32   1.0 on valid output columns, 0.0 on wrap
    fcw_ref  : (CoutP, NcP)      bf16  FC weight, zero-padded
    fcb_ref  : (1, NcP)          f32   FC bias, zero-padded
    o_ref    : (1, NcP)          f32   logits row for batch b (lane-dense)
    gap_ref  : (1, CoutP)        f32   running GAP sum across the t axis
    """
    t = pl.program_id(1)
    n_sp = pl.num_programs(1)

    @pl.when(t == 0)
    def _():
        gap_ref[...] = jnp.zeros_like(gap_ref)

    M = mask_ref.shape[0]          # TH * Wp output rows per tile
    CoutP = w_ref.shape[2]

    # 3x3 conv as 9 shifted (M, Cin) @ (Cin, CoutP) matmuls, f32 accumulation.
    # Offsets are compile-time constants -> static (cheap) ref slices.
    acc = jnp.zeros((M, CoutP), jnp.float32)
    for k in range(9):
        di, dj = divmod(k, 3)
        off = di * Wp + dj
        acc = acc + jnp.dot(x_ref[pl.ds(off, M), :], w_ref[k],
                            preferred_element_type=jnp.float32)

    # bias + ReLU in f32, mask the wrap-around columns, accumulate GAP sum.
    z = jnp.maximum(acc + cb_ref[...], 0.0) * mask_ref[...]
    gap_ref[...] += jnp.sum(z, axis=0, keepdims=True)

    # Finalize: mean over H*W, fused FC head, single lane-dense store.
    @pl.when(t == n_sp - 1)
    def _():
        pooled = (gap_ref[...] * inv_hw).astype(jnp.bfloat16)      # (1, CoutP)
        logits = jnp.dot(pooled, fcw_ref[...],
                         preferred_element_type=jnp.float32) + fcb_ref[...]
        o_ref[...] = logits.astype(o_ref.dtype)


def normal_nn_forward(params, x, tasks_till_now):
    """Equivalent of NormalNN.forward: backbone logits gathered on task cols."""
    B, Cin, H, W = x.shape
    Cout, out_dim = params["fc_w"].shape
    TH = 8 if H % 8 == 0 else H            # spatial row-tile height
    n_sp = H // TH
    Wp = W + 2                             # padded width
    M = TH * Wp                            # output rows per tile (incl. wrap cols)
    M_in = (TH + 3) * Wp                   # input rows per tile (3-row halo)
    CoutP = _round_up(Cout, 128)           # lane-dense channel dim
    NcP = _round_up(out_dim, 128)          # lane-dense logits dim

    # --- input prep (plain JAX glue; ~1.4x input bytes, vs 9x for im2col) ---
    xh = jnp.transpose(x, (0, 2, 3, 1))                       # NCHW -> NHWC
    xp = jnp.pad(xh, ((0, 0), (1, 2), (1, 1), (0, 0)))        # (B, H+3, Wp, Cin)
    tiles = jnp.stack([xp[:, t * TH: t * TH + TH + 3] for t in range(n_sp)],
                      axis=1)                                  # (B, n_sp, TH+3, Wp, Cin)
    x_slabs = tiles.reshape(B, n_sp, M_in, Cin).astype(jnp.bfloat16)

    # --- parameter prep: pad channel dims to 128, cast MXU operands to bf16 ---
    w_taps = jnp.transpose(params["conv_w"], (2, 3, 1, 0)).reshape(9, Cin, Cout)
    w_taps = jnp.pad(w_taps, ((0, 0), (0, 0), (0, CoutP - Cout))).astype(jnp.bfloat16)
    conv_b = jnp.pad(params["conv_b"], (0, CoutP - Cout)).reshape(1, CoutP)
    conv_b = conv_b.astype(jnp.float32)
    fc_w = jnp.pad(params["fc_w"],
                   ((0, CoutP - Cout), (0, NcP - out_dim))).astype(jnp.bfloat16)
    fc_b = jnp.pad(params["fc_b"], (0, NcP - out_dim)).reshape(1, NcP)
    fc_b = fc_b.astype(jnp.float32)

    # valid-column mask: flattened (TH, Wp) rows; only w < W are real outputs.
    mask = (jnp.arange(M) % Wp < W).astype(jnp.float32).reshape(M, 1)

    kernel = functools.partial(_fused_conv_gap_fc_kernel,
                               Wp=Wp, inv_hw=1.0 / float(H * W))

    out = pl.pallas_call(
        kernel,
        out_shape=jax.ShapeDtypeStruct((B, 1, NcP), jnp.float32),
        grid_spec=pltpu.PrefetchScalarGridSpec(
            num_scalar_prefetch=0,
            grid=(B, n_sp),
            in_specs=[
                pl.BlockSpec((None, None, M_in, Cin), lambda b, t: (b, t, 0, 0)),
                pl.BlockSpec((9, Cin, CoutP), lambda b, t: (0, 0, 0)),
                pl.BlockSpec((1, CoutP), lambda b, t: (0, 0)),
                pl.BlockSpec((M, 1), lambda b, t: (0, 0)),
                pl.BlockSpec((CoutP, NcP), lambda b, t: (0, 0)),
                pl.BlockSpec((1, NcP), lambda b, t: (0, 0)),
            ],
            out_specs=pl.BlockSpec((None, 1, NcP), lambda b, t: (b, 0, 0)),
            scratch_shapes=[pltpu.VMEM((1, CoutP), jnp.float32)],
        ),
        compiler_params=pltpu.CompilerParams(
            dimension_semantics=("parallel", "arbitrary"),
            vmem_limit_bytes=32 * 1024 * 1024,
        ),
    )(x_slabs, w_taps, conv_b, mask, fc_w, fc_b)

    logits = out.reshape(B, NcP)[:, :out_dim]
    # TODO(synk): the training-side machinery of NormalNN (optimizer, loss,
    # teacher distillation) is host-side control flow, not kernel work.
    return logits[:, tasks_till_now]


# ----------------------------------------------------------------------------
# Plain-JAX reference (for a correctness sanity check, no torch)
# ----------------------------------------------------------------------------
def reference_forward(params, x, tasks_till_now):
    y = jax.lax.conv_general_dilated(
        x, params["conv_w"], window_strides=(1, 1), padding="SAME",
        dimension_numbers=("NCHW", "OIHW", "NCHW"))
    y = jax.nn.relu(y + params["conv_b"][None, :, None, None])
    pooled = jnp.mean(y, axis=(2, 3))                              # (B, Cout)
    logits = pooled @ params["fc_w"] + params["fc_b"]
    return logits[:, tasks_till_now]


# ----------------------------------------------------------------------------
if __name__ == "__main__":
    key = jax.random.PRNGKey(0)
    B, Cin, H, W = 2, 4, 16, 16
    Cout, out_dim = 16, 10

    # learner_config analogues
    tasks_real = [[0, 1, 2, 3, 4], [5, 6, 7, 8, 9]]
    task_count = 0
    tasks_till_now = jnp.array(
        [j for sub in tasks_real[:task_count + 1] for j in sub], dtype=jnp.int32)

    k1, k2, k3, k4, kx = jax.random.split(key, 5)
    conv_bound = 1.0 / math.sqrt(Cin * 3 * 3)
    fc_bound = 1.0 / math.sqrt(Cout)
    params = {
        "conv_w": jax.random.uniform(k1, (Cout, Cin, 3, 3), jnp.float32,
                                     -conv_bound, conv_bound),
        "conv_b": jax.random.uniform(k2, (Cout,), jnp.float32,
                                     -conv_bound, conv_bound),
        "fc_w": jax.random.uniform(k3, (Cout, out_dim), jnp.float32,
                                   -fc_bound, fc_bound),
        "fc_b": jax.random.uniform(k4, (out_dim,), jnp.float32,
                                   -fc_bound, fc_bound),
    }

    x = jax.random.normal(kx, (B, Cin, H, W), jnp.float32)

    fwd = jax.jit(normal_nn_forward)
    out = fwd(params, x, tasks_till_now)
    out = jax.block_until_ready(out)

    ref = reference_forward(params, x, tasks_till_now)
    assert out.shape == (B, len(tasks_till_now))
    # bf16 MXU operands with f32 accumulation -> loosened tolerance vs f32 ref.
    assert jnp.allclose(out, ref, atol=2e-2, rtol=2e-2), (out, ref)

    print("KERNEL_OK")
</pallas_src>

<mosaic_0001>
module attributes {stable_mosaic.version = 11 : i64} {
  func.func @_fused_conv_gap_fc_kernel(%arg0: i32, %arg1: i32, %arg2: memref<1x1x198x4xbf16, #tpu.memory_space<vmem>>, %arg3: memref<9x4x128xbf16, #tpu.memory_space<vmem>>, %arg4: memref<1x128xf32, #tpu.memory_space<vmem>>, %arg5: memref<144x1xf32, #tpu.memory_space<vmem>>, %arg6: memref<128x128xbf16, #tpu.memory_space<vmem>>, %arg7: memref<1x128xf32, #tpu.memory_space<vmem>>, %arg8: memref<1x1x128xf32, #tpu.memory_space<vmem>>, %arg9: memref<1x128xf32, #tpu.memory_space<vmem>>) attributes {dimension_semantics = [#tpu.dimension_semantics<parallel>, #tpu.dimension_semantics<arbitrary>], iteration_bounds = array<i64: 2, 2>, scalar_prefetch = 0 : i64, scratch_operands = 1 : i64, tpu.core_type = #tpu.core_type<tc>, window_params = [{transform_indices = @transform_0, window_bounds = array<i64: 1, 1, 198, 4>}, {pipeline_mode = #tpu.pipeline_mode<synchronous>, transform_indices = @transform_1, window_bounds = array<i64: 9, 4, 128>}, {pipeline_mode = #tpu.pipeline_mode<synchronous>, transform_indices = @transform_2, window_bounds = array<i64: 1, 128>}, {pipeline_mode = #tpu.pipeline_mode<synchronous>, transform_indices = @transform_3, window_bounds = array<i64: 144, 1>}, {pipeline_mode = #tpu.pipeline_mode<synchronous>, transform_indices = @transform_4, window_bounds = array<i64: 128, 128>}, {pipeline_mode = #tpu.pipeline_mode<synchronous>, transform_indices = @transform_5, window_bounds = array<i64: 1, 128>}, {transform_indices = @transform_6, window_bounds = array<i64: 1, 1, 128>}]} {
    %c0_i32 = arith.constant 0 : i32
    %0 = arith.cmpi eq, %arg1, %c0_i32 : i32
    %1 = arith.extui %0 : i1 to i32
    %c0_i32_0 = arith.constant 0 : i32
    %2 = arith.cmpi ne, %1, %c0_i32_0 : i32
    scf.if %2 {
      %cst_69 = arith.constant 0.000000e+00 : f32
      %74 = vector.broadcast %cst_69 : f32 to vector<1x128xf32>
      %c0_70 = arith.constant 0 : index
      %c0_71 = arith.constant 0 : index
      %75 = vector.load %arg9[%c0_70, %c0_71] : memref<1x128xf32, #tpu.memory_space<vmem>>, vector<1x128xf32>
      tpu.vector_store %arg9[%c0_70, %c0_71], %74 {strides = array<i32>} : memref<1x128xf32, #tpu.memory_space<vmem>>, vector<1x128xf32>,
    } else {
    }
    %cst = arith.constant 0.000000e+00 : f32
    %3 = vector.broadcast %cst : f32 to vector<144x128xf32>
    %c0 = arith.constant 0 : index
    %c0_1 = arith.constant 0 : index
    %c0_2 = arith.constant 0 : index
    %c0_3 = arith.constant 0 : index
    %4 = vector.load %arg2[%c0, %c0_1, %c0_2, %c0_3] : memref<1x1x198x4xbf16, #tpu.memory_space<vmem>>, vector<1x1x144x4xbf16>
    %5 = vector.shape_cast %4 : vector<1x1x144x4xbf16> to vector<144x4xbf16>
    %c0_4 = arith.constant 0 : index
    %c0_5 = arith.constant 0 : index
    %c0_6 = arith.constant 0 : index
    %6 = vector.load %arg3[%c0_4, %c0_5, %c0_6] : memref<9x4x128xbf16, #tpu.memory_space<vmem>>, vector<1x4x128xbf16>
    %7 = vector.shape_cast %6 : vector<1x4x128xbf16> to vector<4x128xbf16>
    %cst_7 = arith.constant dense<0.000000e+00> : vector<144x128xf32>
    %8 = tpu.matmul %5, %7, %cst_7 {dimension_numbers = #tpu.dot_dimension_numbers<[1], [0], [0], [1], [0, 0, 1, 1], [], []>} : vector<144x4xbf16>, vector<4x128xbf16>, vector<144x128xf32> -> vector<144x128xf32>
    %9 = arith.addf %3, %8 : vector<144x128xf32>
    %c0_8 = arith.constant 0 : index
    %c0_9 = arith.constant 0 : index
    %c1 = arith.constant 1 : index
    %c0_10 = arith.constant 0 : index
    %10 = vector.load %arg2[%c0_8, %c0_9, %c1, %c0_10] : memref<1x1x198x4xbf16, #tpu.memory_space<vmem>>, vector<1x1x144x4xbf16>
    %11 = vector.shape_cast %10 : vector<1x1x144x4xbf16> to vector<144x4xbf16>
    %c1_11 = arith.constant 1 : index
    %c0_12 = arith.constant 0 : index
    %c0_13 = arith.constant 0 : index
    %12 = vector.load %arg3[%c1_11, %c0_12, %c0_13] : memref<9x4x128xbf16, #tpu.memory_space<vmem>>, vector<1x4x128xbf16>
    %13 = vector.shape_cast %12 : vector<1x4x128xbf16> to vector<4x128xbf16>
    %cst_14 = arith.constant dense<0.000000e+00> : vector<144x128xf32>
    %14 = tpu.matmul %11, %13, %cst_14 {dimension_numbers = #tpu.dot_dimension_numbers<[1], [0], [0], [1], [0, 0, 1, 1], [], []>} : vector<144x4xbf16>, vector<4x128xbf16>, vector<144x128xf32> -> vector<144x128xf32>
    %15 = arith.addf %9, %14 : vector<144x128xf32>
    %c0_15 = arith.constant 0 : index
    %c0_16 = arith.constant 0 : index
    %c2 = arith.constant 2 : index
    %c0_17 = arith.constant 0 : index
    %16 = vector.load %arg2[%c0_15, %c0_16, %c2, %c0_17] : memref<1x1x198x4xbf16, #tpu.memory_space<vmem>>, vector<1x1x144x4xbf16>
    %17 = vector.shape_cast %16 : vector<1x1x144x4xbf16> to vector<144x4xbf16>
    %c2_18 = arith.constant 2 : index
    %c0_19 = arith.constant 0 : index
    %c0_20 = arith.constant 0 : index
    %18 = vector.load %arg3[%c2_18, %c0_19, %c0_20] : memref<9x4x128xbf16, #tpu.memory_space<vmem>>, vector<1x4x128xbf16>
    %19 = vector.shape_cast %18 : vector<1x4x128xbf16> to vector<4x128xbf16>
    %cst_21 = arith.constant dense<0.000000e+00> : vector<144x128xf32>
    %20 = tpu.matmul %17, %19, %cst_21 {dimension_numbers = #tpu.dot_dimension_numbers<[1], [0], [0], [1], [0, 0, 1, 1], [], []>} : vector<144x4xbf16>, vector<4x128xbf16>, vector<144x128xf32> -> vector<144x128xf32>
    %21 = arith.addf %15, %20 : vector<144x128xf32>
    %c0_22 = arith.constant 0 : index
    %c0_23 = arith.constant 0 : index
    %c18 = arith.constant 18 : index
    %c0_24 = arith.constant 0 : index
    %22 = vector.load %arg2[%c0_22, %c0_23, %c18, %c0_24] : memref<1x1x198x4xbf16, #tpu.memory_space<vmem>>, vector<1x1x144x4xbf16>
    %23 = vector.shape_cast %22 : vector<1x1x144x4xbf16> to vector<144x4xbf16>
    %c3 = arith.constant 3 : index
    %c0_25 = arith.constant 0 : index
    %c0_26 = arith.constant 0 : index
    %24 = vector.load %arg3[%c3, %c0_25, %c0_26] : memref<9x4x128xbf16, #tpu.memory_space<vmem>>, vector<1x4x128xbf16>
    %25 = vector.shape_cast %24 : vector<1x4x128xbf16> to vector<4x128xbf16>
    %cst_27 = arith.constant dense<0.000000e+00> : vector<144x128xf32>
    %26 = tpu.matmul %23, %25, %cst_27 {dimension_numbers = #tpu.dot_dimension_numbers<[1], [0], [0], [1], [0, 0, 1, 1], [], []>} : vector<144x4xbf16>, vector<4x128xbf16>, vector<144x128xf32> -> vector<144x128xf32>
    %27 = arith.addf %21, %26 : vector<144x128xf32>
    %c0_28 = arith.constant 0 : index
    %c0_29 = arith.constant 0 : index
    %c19 = arith.constant 19 : index
    %c0_30 = arith.constant 0 : index
    %28 = vector.load %arg2[%c0_28, %c0_29, %c19, %c0_30] : memref<1x1x198x4xbf16, #tpu.memory_space<vmem>>, vector<1x1x144x4xbf16>
    %29 = vector.shape_cast %28 : vector<1x1x144x4xbf16> to vector<144x4xbf16>
    %c4 = arith.constant 4 : index
    %c0_31 = arith.constant 0 : index
    %c0_32 = arith.constant 0 : index
    %30 = vector.load %arg3[%c4, %c0_31, %c0_32] : memref<9x4x128xbf16, #tpu.memory_space<vmem>>, vector<1x4x128xbf16>
    %31 = vector.shape_cast %30 : vector<1x4x128xbf16> to vector<4x128xbf16>
    %cst_33 = arith.constant dense<0.000000e+00> : vector<144x128xf32>
    %32 = tpu.matmul %29, %31, %cst_33 {dimension_numbers = #tpu.dot_dimension_numbers<[1], [0], [0], [1], [0, 0, 1, 1], [], []>} : vector<144x4xbf16>, vector<4x128xbf16>, vector<144x128xf32> -> vector<144x128xf32>
    %33 = arith.addf %27, %32 : vector<144x128xf32>
    %c0_34 = arith.constant 0 : index
    %c0_35 = arith.constant 0 : index
    %c20 = arith.constant 20 : index
    %c0_36 = arith.constant 0 : index
    %34 = vector.load %arg2[%c0_34, %c0_35, %c20, %c0_36] : memref<1x1x198x4xbf16, #tpu.memory_space<vmem>>, vector<1x1x144x4xbf16>
    %35 = vector.shape_cast %34 : vector<1x1x144x4xbf16> to vector<144x4xbf16>
    %c5 = arith.constant 5 : index
    %c0_37 = arith.constant 0 : index
    %c0_38 = arith.constant 0 : index
    %36 = vector.load %arg3[%c5, %c0_37, %c0_38] : memref<9x4x128xbf16, #tpu.memory_space<vmem>>, vector<1x4x128xbf16>
    %37 = vector.shape_cast %36 : vector<1x4x128xbf16> to vector<4x128xbf16>
    %cst_39 = arith.constant dense<0.000000e+00> : vector<144x128xf32>
    %38 = tpu.matmul %35, %37, %cst_39 {dimension_numbers = #tpu.dot_dimension_numbers<[1], [0], [0], [1], [0, 0, 1, 1], [], []>} : vector<144x4xbf16>, vector<4x128xbf16>, vector<144x128xf32> -> vector<144x128xf32>
    %39 = arith.addf %33, %38 : vector<144x128xf32>
    %c0_40 = arith.constant 0 : index
    %c0_41 = arith.constant 0 : index
    %c36 = arith.constant 36 : index
    %c0_42 = arith.constant 0 : index
    %40 = vector.load %arg2[%c0_40, %c0_41, %c36, %c0_42] : memref<1x1x198x4xbf16, #tpu.memory_space<vmem>>, vector<1x1x144x4xbf16>
    %41 = vector.shape_cast %40 : vector<1x1x144x4xbf16> to vector<144x4xbf16>
    %c6 = arith.constant 6 : index
    %c0_43 = arith.constant 0 : index
    %c0_44 = arith.constant 0 : index
    %42 = vector.load %arg3[%c6, %c0_43, %c0_44] : memref<9x4x128xbf16, #tpu.memory_space<vmem>>, vector<1x4x128xbf16>
    %43 = vector.shape_cast %42 : vector<1x4x128xbf16> to vector<4x128xbf16>
    %cst_45 = arith.constant dense<0.000000e+00> : vector<144x128xf32>
    %44 = tpu.matmul %41, %43, %cst_45 {dimension_numbers = #tpu.dot_dimension_numbers<[1], [0], [0], [1], [0, 0, 1, 1], [], []>} : vector<144x4xbf16>, vector<4x128xbf16>, vector<144x128xf32> -> vector<144x128xf32>
    %45 = arith.addf %39, %44 : vector<144x128xf32>
    %c0_46 = arith.constant 0 : index
    %c0_47 = arith.constant 0 : index
    %c37 = arith.constant 37 : index
    %c0_48 = arith.constant 0 : index
    %46 = vector.load %arg2[%c0_46, %c0_47, %c37, %c0_48] : memref<1x1x198x4xbf16, #tpu.memory_space<vmem>>, vector<1x1x144x4xbf16>
    %47 = vector.shape_cast %46 : vector<1x1x144x4xbf16> to vector<144x4xbf16>
    %c7 = arith.constant 7 : index
    %c0_49 = arith.constant 0 : index
    %c0_50 = arith.constant 0 : index
    %48 = vector.load %arg3[%c7, %c0_49, %c0_50] : memref<9x4x128xbf16, #tpu.memory_space<vmem>>, vector<1x4x128xbf16>
    %49 = vector.shape_cast %48 : vector<1x4x128xbf16> to vector<4x128xbf16>
    %cst_51 = arith.constant dense<0.000000e+00> : vector<144x128xf32>
    %50 = tpu.matmul %47, %49, %cst_51 {dimension_numbers = #tpu.dot_dimension_numbers<[1], [0], [0], [1], [0, 0, 1, 1], [], []>} : vector<144x4xbf16>, vector<4x128xbf16>, vector<144x128xf32> -> vector<144x128xf32>
    %51 = arith.addf %45, %50 : vector<144x128xf32>
    %c0_52 = arith.constant 0 : index
    %c0_53 = arith.constant 0 : index
    %c38 = arith.constant 38 : index
    %c0_54 = arith.constant 0 : index
    %52 = vector.load %arg2[%c0_52, %c0_53, %c38, %c0_54] : memref<1x1x198x4xbf16, #tpu.memory_space<vmem>>, vector<1x1x144x4xbf16>
    %53 = vector.shape_cast %52 : vector<1x1x144x4xbf16> to vector<144x4xbf16>
    %c8 = arith.constant 8 : index
    %c0_55 = arith.constant 0 : index
    %c0_56 = arith.constant 0 : index
    %54 = vector.load %arg3[%c8, %c0_55, %c0_56] : memref<9x4x128xbf16, #tpu.memory_space<vmem>>, vector<1x4x128xbf16>
    %55 = vector.shape_cast %54 : vector<1x4x128xbf16> to vector<4x128xbf16>
    %cst_57 = arith.constant dense<0.000000e+00> : vector<144x128xf32>
    %56 = tpu.matmul %53, %55, %cst_57 {dimension_numbers = #tpu.dot_dimension_numbers<[1], [0], [0], [1], [0, 0, 1, 1], [], []>} : vector<144x4xbf16>, vector<4x128xbf16>, vector<144x128xf32> -> vector<144x128xf32>
    %57 = arith.addf %51, %56 : vector<144x128xf32>
    %c0_58 = arith.constant 0 : index
    %c0_59 = arith.constant 0 : index
    %58 = vector.load %arg4[%c0_58, %c0_59] : memref<1x128xf32, #tpu.memory_space<vmem>>, vector<1x128xf32>
    %59 = vector.broadcast %58 : vector<1x128xf32> to vector<144x128xf32>
    %60 = arith.addf %57, %59 : vector<144x128xf32>
    %cst_60 = arith.constant 0.000000e+00 : f32
    %61 = vector.broadcast %cst_60 : f32 to vector<144x128xf32>
    %62 = arith.maximumf %60, %61 : vector<144x128xf32>
    %c0_61 = arith.constant 0 : index
    %c0_62 = arith.constant 0 : index
    %63 = vector.load %arg5[%c0_61, %c0_62] : memref<144x1xf32, #tpu.memory_space<vmem>>, vector<144x1xf32>
    %64 = vector.broadcast %63 : vector<144x1xf32> to vector<144x128xf32>
    %65 = arith.mulf %62, %64 : vector<144x128xf32>
    %c0_63 = arith.constant 0 : index
    %c0_64 = arith.constant 0 : index
    %66 = vector.load %arg9[%c0_63, %c0_64] : memref<1x128xf32, #tpu.memory_space<vmem>>, vector<1x128xf32>
    %cst_65 = arith.constant dense<0.000000e+00> : vector<128xf32>
    %67 = vector.multi_reduction <add>, %65, %cst_65 [0] : vector<144x128xf32> to vector<128xf32>
    %68 = vector.shape_cast %67 : vector<128xf32> to vector<1x128xf32>
    %69 = arith.addf %66, %68 : vector<1x128xf32>
    %c0_66 = arith.constant 0 : index
    %c0_67 = arith.constant 0 : index
    %70 = vector.load %arg9[%c0_66, %c0_67] : memref<1x128xf32, #tpu.memory_space<vmem>>, vector<1x128xf32>
    tpu.vector_store %arg9[%c0_66, %c0_67], %69 {strides = array<i32>} : memref<1x128xf32, #tpu.memory_space<vmem>>, vector<1x128xf32>,
    %c1_i32 = arith.constant 1 : i32
    %71 = arith.cmpi eq, %arg1, %c1_i32 : i32
    %72 = arith.extui %71 : i1 to i32
    %c0_i32_68 = arith.constant 0 : i32
    %73 = arith.cmpi ne, %72, %c0_i32_68 : i32
    scf.if %73 {
      %c0_69 = arith.constant 0 : index
      %c0_70 = arith.constant 0 : index
      %74 = vector.load %arg9[%c0_69, %c0_70] : memref<1x128xf32, #tpu.memory_space<vmem>>, vector<1x128xf32>
      %cst_71 = arith.constant 3.906250e-03 : f32
      %75 = vector.broadcast %cst_71 : f32 to vector<1x128xf32>
      %76 = arith.mulf %74, %75 : vector<1x128xf32>
      %77 = arith.truncf %76 : vector<1x128xf32> to vector<1x128xbf16>
      %c0_72 = arith.constant 0 : index
      %c0_73 = arith.constant 0 : index
      %78 = vector.load %arg6[%c0_72, %c0_73] : memref<128x128xbf16, #tpu.memory_space<vmem>>, vector<128x128xbf16>
      %cst_74 = arith.constant dense<0.000000e+00> : vector<1x128xf32>
      %79 = tpu.matmul %77, %78, %cst_74 {dimension_numbers = #tpu.dot_dimension_numbers<[1], [0], [0], [1], [0, 0, 1, 1], [], []>} : vector<1x128xbf16>, vector<128x128xbf16>, vector<1x128xf32> -> vector<1x128xf32>
      %c0_75 = arith.constant 0 : index
      %c0_76 = arith.constant 0 : index
      %80 = vector.load %arg7[%c0_75, %c0_76] : memref<1x128xf32, #tpu.memory_space<vmem>>, vector<1x128xf32>
      %81 = arith.addf %79, %80 : vector<1x128xf32>
      %c0_77 = arith.constant 0 : index
      %c0_78 = arith.constant 0 : index
      %c0_79 = arith.constant 0 : index
      %82 = vector.load %arg8[%c0_77, %c0_78, %c0_79] : memref<1x1x128xf32, #tpu.memory_space<vmem>>, vector<1x1x128xf32>
      %83 = vector.shape_cast %82 : vector<1x1x128xf32> to vector<1x128xf32>
      %84 = vector.shape_cast %81 : vector<1x128xf32> to vector<1x1x128xf32>
      tpu.vector_store %arg8[%c0_77, %c0_78, %c0_79], %84 {strides = array<i32>} : memref<1x1x128xf32, #tpu.memory_space<vmem>>, vector<1x1x128xf32>,
    } else {
    }
    return
  }
  func.func @transform_0(%arg0: i32, %arg1: i32) -> (i32, i32, i32, i32) {
    %c0_i32 = arith.constant 0 : i32
    %c0_i32_0 = arith.constant 0 : i32
    %c0_i32_1 = arith.constant 0 : i32
    return %arg0, %arg1, %c0_i32, %c0_i32_0 : i32, i32, i32, i32
  }
  func.func @transform_1(%arg0: i32, %arg1: i32) -> (i32, i32, i32) {
    %c0_i32 = arith.constant 0 : i32
    %c0_i32_0 = arith.constant 0 : i32
    %c0_i32_1 = arith.constant 0 : i32
    %c0_i32_2 = arith.constant 0 : i32
    return %c0_i32, %c0_i32_0, %c0_i32_1 : i32, i32, i32
  }
  func.func @transform_2(%arg0: i32, %arg1: i32) -> (i32, i32) {
    %c0_i32 = arith.constant 0 : i32
    %c0_i32_0 = arith.constant 0 : i32
    %c0_i32_1 = arith.constant 0 : i32
    return %c0_i32, %c0_i32_0 : i32, i32
  }
  func.func @transform_3(%arg0: i32, %arg1: i32) -> (i32, i32) {
    %c0_i32 = arith.constant 0 : i32
    %c0_i32_0 = arith.constant 0 : i32
    %c0_i32_1 = arith.constant 0 : i32
    return %c0_i32, %c0_i32_0 : i32, i32
  }
  func.func @transform_4(%arg0: i32, %arg1: i32) -> (i32, i32) {
    %c0_i32 = arith.constant 0 : i32
    %c0_i32_0 = arith.constant 0 : i32
    %c0_i32_1 = arith.constant 0 : i32
    return %c0_i32, %c0_i32_0 : i32, i32
  }
  func.func @transform_5(%arg0: i32, %arg1: i32) -> (i32, i32) {
    %c0_i32 = arith.constant 0 : i32
    %c0_i32_0 = arith.constant 0 : i32
    %c0_i32_1 = arith.constant 0 : i32
    return %c0_i32, %c0_i32_0 : i32, i32
  }
  func.func @transform_6(%arg0: i32, %arg1: i32) -> (i32, i32, i32) {
    %c0_i32 = arith.constant 0 : i32
    %c0_i32_0 = arith.constant 0 : i32
    %c0_i32_1 = arith.constant 0 : i32
    return %arg0, %c0_i32, %c0_i32_0 : i32, i32, i32
  }
}

</mosaic_0001>

<llo_original>
// kernel: normal_nn_forward.1
$region0: #{normal_nn_forward.1}
  #allocation0 [shape = 'u32[]', space=smem, size = 0x4, offset = 0x4, fixed_abs, tag = 'smem constant byte address 0x4 - core index']
  #allocation1 [shape = 'u32[144,128]{1,0:T(1,128)}', space=vmem, size = 0x12000, scoped, tag = 'internal scratch']
  #allocation2 [shape = 'f32[1,128]{1,0:T(1,128)}', space=vmem, size = 0x200, scoped, tag = 'scratch operand']
  %s0 = inlined_call_operand.vmem [shape: bf16[2,2,198,4], index: 0, kind: input, shape index: {}]
  %s1 = inlined_call_operand.vmem [shape: bf16[9,4,128], index: 1, kind: input, shape index: {}]
  %s2 = inlined_call_operand.vmem [shape: f32[1,128], index: 2, kind: input, shape index: {}]
  %s3 = inlined_call_operand.vmem [shape: f32[144,1], index: 3, kind: input, shape index: {}]
  %s4 = inlined_call_operand.vmem [shape: bf16[128,128], index: 4, kind: input, shape index: {}]
  %s5 = inlined_call_operand.vmem [shape: f32[1,128], index: 5, kind: input, shape index: {}]
  %s6 = inlined_call_operand.vmem [shape: f32[2,1,128], index: 6, kind: output, shape index: {}]
  %s7 = sld [smem:[#allocation0]]
  $region65: #{normal_nn_forward.1} parent=0
    _
  %s9 = ssub.s32 1, %s7
  %s10 = scalar_select 0, %s9, %s7
  loop: start=0, step=1, limit=6
  $region2: #{normal_nn_forward.1} parent=0 // loop_pre_header
    _
  $region3: #{normal_nn_forward.1} parent=0 // loop_header
    %s12 = sphi 0, %s16
    %p13 = scmp.ge.s32.totalorder %s12, 6
    %s19 = sphi 0, %s31
    %s20 = sphi 0, %s27
    %s21 = sphi 0, %s19
    %s22 = sphi 0, %s20
    %s23 = sphi 0, %s21
    %s24 = sphi 0, %s22
    %s36 = sphi 0, %s38
    %s39 = sphi 0, %s36
    %s40 = sphi 0, %s39
    %s56 = sphi 0, %s40
    %s60 = sphi 0, %s60
    %s62 = sphi 0, %s60
    %s63 = sphi 0, %s62
    %s77 = sphi 0, %s63
    %s81 = sphi 0, %s81
    %s83 = sphi 0, %s81
    %s84 = sphi 0, %s83
    %s98 = sphi 0, %s84
    %s102 = sphi 0, %s102
    %s104 = sphi 0, %s102
    %s105 = sphi 0, %s104
    %s119 = sphi 0, %s105
    %s123 = sphi 0, %s123
    %s125 = sphi 0, %s123
    %s126 = sphi 0, %s125
    %s140 = sphi 0, %s126
    %s144 = sphi 0, %s144
    %s146 = sphi 0, %s144
    %s147 = sphi 0, %s146
    %s161 = sphi 0, %s147
    %s167 = sphi 0, %s169
    %s170 = sphi 0, %s167
    %s171 = sphi 0, %s170
    %s187 = sphi 0, %s171
  $region4: #{normal_nn_forward.1} parent=0 // loop_header_branch
    %15 = sbr.rel (%p13) target = $region8
  $region5: #{normal_nn_forward.1} parent=0 // loop_body
    %s17 = ssub.s32 %s12, 1
    %s18 = ssub.s32 %s12, 2
    %s25 = sadd.s32 1, %s20
    %p26 = scmp.ge.s32.totalorder %s25, 2
    %s27 = scalar_select %p26, 0, %s25
    %s28 = sadd.s32 1, %s19
    %s29 = scalar_select %p26, %s28, %s19
    %p30 = scmp.ge.s32.totalorder %s29, 2
    %s31 = scalar_select %p30, 0, %s29
    %s32 = ssub.s32 %s19, %s31
    %s33 = ssub.s32 %s20, %s27
    %s34 = sor.u32 %s32, %s33
    %p35 = scmp.eq.s32.totalorder %s34, 0
    %s37 = sadd.s32 %s36, 1
    %s38 = scalar_select %p35, %s36, %s37
    %p41 = pneg %p35
    %p42 = scmp.eq.s32.totalorder %s12, 3
    %p43 = por %p41, %p42
    %p44 = scmp.ne.s32.totalorder %s36, %s39
    %p45 = scmp.eq.s32.totalorder %s12, 0
    %p46 = por %p44, %p45
    %p47 = scmp.ne.s32.totalorder %s36, %s39
    %p48 = scmp.eq.s32.totalorder %s17, 3
    %p49 = por %p47, %p48
    %p50 = scmp.ne.s32.totalorder %s39, %s40
    %p51 = scmp.eq.s32.totalorder %s17, 0
    %p52 = por %p50, %p51
    %p53 = scmp.ne.s32.totalorder %s39, %s40
    %p54 = scmp.eq.s32.totalorder %s18, 3
    %p55 = por %p53, %p54
    %p57 = scmp.ne.s32.totalorder %s40, %s56
    %p58 = scmp.eq.s32.totalorder %s18, 0
    %p59 = por %p57, %p58
    %s61 = sadd.s32 %s60, 1
    %p64 = scmp.eq.s32.totalorder %s12, 3
    %p65 = scmp.ne.s32.totalorder %s60, %s62
    %p66 = scmp.eq.s32.totalorder %s12, 0
    %p67 = por %p65, %p66
    %p68 = scmp.ne.s32.totalorder %s60, %s62
    %p69 = scmp.eq.s32.totalorder %s17, 3
    %p70 = por %p68, %p69
    %p71 = scmp.ne.s32.totalorder %s62, %s63
    %p72 = scmp.eq.s32.totalorder %s17, 0
    %p73 = por %p71, %p72
    %p74 = scmp.ne.s32.totalorder %s62, %s63
    %p75 = scmp.eq.s32.totalorder %s18, 3
    %p76 = por %p74, %p75
    %p78 = scmp.ne.s32.totalorder %s63, %s77
    %p79 = scmp.eq.s32.totalorder %s18, 0
    %p80 = por %p78, %p79
    %s82 = sadd.s32 %s81, 1
    %p85 = scmp.eq.s32.totalorder %s12, 3
    %p86 = scmp.ne.s32.totalorder %s81, %s83
    %p87 = scmp.eq.s32.totalorder %s12, 0
    %p88 = por %p86, %p87
    %p89 = scmp.ne.s32.totalorder %s81, %s83
    %p90 = scmp.eq.s32.totalorder %s17, 3
    %p91 = por %p89, %p90
    %p92 = scmp.ne.s32.totalorder %s83, %s84
    %p93 = scmp.eq.s32.totalorder %s17, 0
    %p94 = por %p92, %p93
    %p95 = scmp.ne.s32.totalorder %s83, %s84
    %p96 = scmp.eq.s32.totalorder %s18, 3
    %p97 = por %p95, %p96
    %p99 = scmp.ne.s32.totalorder %s84, %s98
    %p100 = scmp.eq.s32.totalorder %s18, 0
    %p101 = por %p99, %p100
    %s103 = sadd.s32 %s102, 1
    %p106 = scmp.eq.s32.totalorder %s12, 3
    %p107 = scmp.ne.s32.totalorder %s102, %s104
    %p108 = scmp.eq.s32.totalorder %s12, 0
    %p109 = por %p107, %p108
    %p110 = scmp.ne.s32.totalorder %s102, %s104
    %p111 = scmp.eq.s32.totalorder %s17, 3
    %p112 = por %p110, %p111
    %p113 = scmp.ne.s32.totalorder %s104, %s105
    %p114 = scmp.eq.s32.totalorder %s17, 0
    %p115 = por %p113, %p114
    %p116 = scmp.ne.s32.totalorder %s104, %s105
    %p117 = scmp.eq.s32.totalorder %s18, 3
    %p118 = por %p116, %p117
    %p120 = scmp.ne.s32.totalorder %s105, %s119
    %p121 = scmp.eq.s32.totalorder %s18, 0
    %p122 = por %p120, %p121
    %s124 = sadd.s32 %s123, 1
    %p127 = scmp.eq.s32.totalorder %s12, 3
    %p128 = scmp.ne.s32.totalorder %s123, %s125
    %p129 = scmp.eq.s32.totalorder %s12, 0
    %p130 = por %p128, %p129
    %p131 = scmp.ne.s32.totalorder %s123, %s125
    %p132 = scmp.eq.s32.totalorder %s17, 3
    %p133 = por %p131, %p132
    %p134 = scmp.ne.s32.totalorder %s125, %s126
    %p135 = scmp.eq.s32.totalorder %s17, 0
    %p136 = por %p134, %p135
    %p137 = scmp.ne.s32.totalorder %s125, %s126
    %p138 = scmp.eq.s32.totalorder %s18, 3
    %p139 = por %p137, %p138
    %p141 = scmp.ne.s32.totalorder %s126, %s140
    %p142 = scmp.eq.s32.totalorder %s18, 0
    %p143 = por %p141, %p142
    %s145 = sadd.s32 %s144, 1
    %p148 = scmp.eq.s32.totalorder %s12, 3
    %p149 = scmp.ne.s32.totalorder %s144, %s146
    %p150 = scmp.eq.s32.totalorder %s12, 0
    %p151 = por %p149, %p150
    %p152 = scmp.ne.s32.totalorder %s144, %s146
    %p153 = scmp.eq.s32.totalorder %s17, 3
    %p154 = por %p152, %p153
    %p155 = scmp.ne.s32.totalorder %s146, %s147
    %p156 = scmp.eq.s32.totalorder %s17, 0
    %p157 = por %p155, %p156
    %p158 = scmp.ne.s32.totalorder %s146, %s147
    %p159 = scmp.eq.s32.totalorder %s18, 3
    %p160 = por %p158, %p159
    %p162 = scmp.ne.s32.totalorder %s147, %s161
    %p163 = scmp.eq.s32.totalorder %s18, 0
    %p164 = por %p162, %p163
    %s165 = ssub.s32 %s19, %s31
    %p166 = scmp.eq.s32.totalorder %s165, 0
    %s168 = sadd.s32 %s167, 1
    %s169 = scalar_select %p166, %s167, %s168
    %p172 = pneg %p166
    %p173 = scmp.eq.s32.totalorder %s12, 3
    %p174 = por %p172, %p173
    %p175 = scmp.ne.s32.totalorder %s167, %s170
    %p176 = scmp.eq.s32.totalorder %s12, 0
    %p177 = por %p175, %p176
    %p178 = scmp.ne.s32.totalorder %s167, %s170
    %p179 = scmp.eq.s32.totalorder %s17, 3
    %p180 = por %p178, %p179
    %p181 = scmp.ne.s32.totalorder %s170, %s171
    %p182 = scmp.eq.s32.totalorder %s17, 0
    %p183 = por %p181, %p182
    %p184 = scmp.ne.s32.totalorder %s170, %s171
    %p185 = scmp.eq.s32.totalorder %s18, 3
    %p186 = por %p184, %p185
    %p188 = scmp.ne.s32.totalorder %s171, %s187
    %p189 = scmp.eq.s32.totalorder %s18, 0
    %p190 = por %p188, %p189
    %p191 = scmp.le.s32.totalorder 1, %s12
    %p192 = scmp.lt.s32.totalorder %s12, 5
    %p193 = pnand %p191, %p192
    %p194 = pneg %p193
    // Predicated region
    $region9: #{normal_nn_forward.1} parent=5 // pred_check
      _
    $region10: #{normal_nn_forward.1} parent=5 // pred_check_branch
      %196 = sbr.rel (%p193) target = $region12
    $region11: #{normal_nn_forward.1} parent=5 // pred_region
      %s197 = ssub.s32 %s12, 1
      // Predicated region
      $region13: #{normal_nn_forward.1} parent=11 // pred_check
        %p198 = pneg %p73
      $region14: #{normal_nn_forward.1} parent=11 // pred_check_branch
        %200 = sbr.rel (%p198) target = $region16
      $region15: #{normal_nn_forward.1} parent=11 // pred_region
        _
      $region16: #{normal_nn_forward.1} parent=11 // pred_fallthru
        _
      // Predicated region
      $region17: #{normal_nn_forward.1} parent=11 // pred_check
        %p201 = pneg %p94
      $region18: #{normal_nn_forward.1} parent=11 // pred_check_branch
        %203 = sbr.rel (%p201) target = $region20
      $region19: #{normal_nn_forward.1} parent=11 // pred_region
        _
      $region20: #{normal_nn_forward.1} parent=11 // pred_fallthru
        _
      // Predicated region
      $region21: #{normal_nn_forward.1} parent=11 // pred_check
        %p204 = pneg %p115
      $region22: #{normal_nn_forward.1} parent=11 // pred_check_branch
        %206 = sbr.rel (%p204) target = $region24
      $region23: #{normal_nn_forward.1} parent=11 // pred_region
        _
      $region24: #{normal_nn_forward.1} parent=11 // pred_fallthru
        _
      // Predicated region
      $region25: #{normal_nn_forward.1} parent=11 // pred_check
        %p207 = pneg %p136
      $region26: #{normal_nn_forward.1} parent=11 // pred_check_branch
        %209 = sbr.rel (%p207) target = $region28
      $region27: #{normal_nn_forward.1} parent=11 // pred_region
        _
      $region28: #{normal_nn_forward.1} parent=11 // pred_fallthru
        _
      // Predicated region
      $region29: #{normal_nn_forward.1} parent=11 // pred_check
        %p210 = pneg %p157
      $region30: #{normal_nn_forward.1} parent=11 // pred_check_branch
        %212 = sbr.rel (%p210) target = $region32
      $region31: #{normal_nn_forward.1} parent=11 // pred_region
        _
      $region32: #{normal_nn_forward.1} parent=11 // pred_fallthru
        _
    $region12: #{normal_nn_forward.1} parent=5 // pred_fallthru
      _
    %p213 = scmp.lt.s32.totalorder %s12, 4
    // Predicated region
    $region33: #{normal_nn_forward.1} parent=5 // pred_check
      %p214 = pneg %p213
    $region34: #{normal_nn_forward.1} parent=5 // pred_check_branch
      %216 = sbr.rel (%p214) target = $region36
    $region35: #{normal_nn_forward.1} parent=5 // pred_region
      // Predicated region
      $region37: #{normal_nn_forward.1} parent=35 // pred_check
        %p217 = pneg %p46
      $region38: #{normal_nn_forward.1} parent=35 // pred_check_branch
        %219 = sbr.rel (%p217) target = $region40
      $region39: #{normal_nn_forward.1} parent=35 // pred_region
        %p220 = scmp.lt.s32.totalorder %s19, 1
        %s221 = scalar_select %p220, %s19, 1
        %p222 = scmp.lt.s32.totalorder %s20, 1
        %s223 = scalar_select %p222, %s20, 1
        %s224 = smul.addr %s223, 25
        %s225 = smul.addr %s221, 50
        %s226 = sadd.s32 %s224, %s225
        %s227 = smul.addr %s226, 4
        %s228 = scalar_lea.vmem %s0, %s227
      $region40: #{normal_nn_forward.1} parent=35 // pred_fallthru
        _
    $region36: #{normal_nn_forward.1} parent=5 // pred_fallthru
      _
    %p229 = scmp.le.s32.totalorder 1, %s12
    %p230 = scmp.lt.s32.totalorder %s12, 5
    %p231 = pnand %p229, %p230
    %p232 = pneg %p231
    // Predicated region
    $region41: #{normal_nn_forward.1} parent=5 // pred_check
      _
    $region42: #{normal_nn_forward.1} parent=5 // pred_check_branch
      %234 = sbr.rel (%p231) target = $region44
    $region43: #{normal_nn_forward.1} parent=5 // pred_region
      %s235 = ssub.s32 %s12, 1
      %p236 = scmp.lt.s32.totalorder %s21, 1
      %s237 = scalar_select %p236, %s21, 1
      %p238 = scmp.lt.s32.totalorder %s22, 1
      %s239 = scalar_select %p238, %s22, 1
      %s240 = smul.addr %s239, 25
      %s241 = smul.addr %s237, 50
      %s242 = sadd.s32 %s240, %s241
      %s243 = smul.addr %s242, 4
      %s244 = scalar_lea.vmem %s0, %s243
      %p245 = pneg %p52
      %p246 = pneg %p49
      %p247 = pneg %p73
      %p248 = pneg %p70
      %p249 = pneg %p94
      %p250 = pneg %p91
      %p251 = pneg %p115
      %p252 = pneg %p112
      %p253 = pneg %p136
      %p254 = pneg %p133
      %p255 = pneg %p157
      %p256 = pneg %p154
      %p257 = pneg %p183
      %p258 = pneg %p180
      %p259 = scmp.lt.s32.totalorder %s21, 1
      %s260 = scalar_select %p259, %s21, 1
      %s261 = scalar_lea.vmem %s6, %s260
      %p262 = scmp.lt.s32.totalorder %s21, 1
      %s263 = scalar_select %p262, %s21, 1
      %p264 = scmp.lt.s32.totalorder %s22, 1
      %s265 = scalar_select %p264, %s22, 1
      %s266 = smul.addr %s265, 25
      %s267 = smul.addr %s263, 50
      %s268 = sadd.s32 %s266, %s267
      %s269 = smul.addr %s268, 4
      %s270 = scalar_lea.vmem %s0, %s269
      %p271 = scmp.lt.s32.totalorder %s21, 1
      %s272 = scalar_select %p271, %s21, 1
      %s273 = scalar_lea.vmem %s6, %s272
      %p275 = scmp.eq.s32.totalorder %s22, 0
      // Predicated region
      $region45: #{normal_nn_forward.1} parent=43 // pred_check
        %p276 = pneg %p275
      $region46: #{normal_nn_forward.1} parent=43 // pred_check_branch
        %278 = sbr.rel (%p276) target = $region48
      $region47: #{normal_nn_forward.1} parent=43 // pred_region
        %279 = vst [vmem:[#allocation2] sm:$0x1] 0.0
      $region48: #{normal_nn_forward.1} parent=43 // pred_fallthru
        _
      %v280 = vld [vmem:[%s270] sm:$0xf]
      %v281 = vld [vmem:[%s270 + $0x4] sm:$0xf]
      %v282 = vld [vmem:[%s270 + $0x8] sm:$0xf]
      %v283 = vld [vmem:[%s270 + $0xc] sm:$0xf]
      %v284 = vld [vmem:[%s270 + $0x10] sm:$0xf]
      %v285 = vld [vmem:[%s270 + $0x14] sm:$0xf]
      %v286 = vld [vmem:[%s270 + $0x18] sm:$0xf]
      %v287 = vld [vmem:[%s270 + $0x1c] sm:$0xf]
      %v288 = vld [vmem:[%s270 + $0x20] sm:$0xf]
      %v289 = vld [vmem:[%s270 + $0x24] sm:$0xf]
      %v290 = vld [vmem:[%s270 + $0x28] sm:$0xf]
      %v291 = vld [vmem:[%s270 + $0x2c] sm:$0xf]
      %v292 = vld [vmem:[%s270 + $0x30] sm:$0xf]
      %v293 = vld [vmem:[%s270 + $0x34] sm:$0xf]
      %v294 = vld [vmem:[%s270 + $0x38] sm:$0xf]
      %v295 = vld [vmem:[%s270 + $0x3c] sm:$0xf]
      %v296 = vld [vmem:[%s270 + $0x40] sm:$0xf]
      %v297 = vld [vmem:[%s270 + $0x44] sm:$0xf]
      %v298 = vld [vmem:[%s1] sm:$0x3]
      %v299 = vld [vmem:[%s270 + $0x48] sm:$0x1]
      %s300 = scalar_lea.vmem %s1, 2
      %v301 = vld [vmem:[%s300] sm:$0x3]
      %v321 = vunpack.c.l.b16 %v280
      %v322 = vunpack.c.l.b16 %v281
      %v323 = vunpack.c.l.b16 %v282
      %v324 = vunpack.c.l.b16 %v283
      %v325 = vunpack.c.l.b16 %v284
      %v326 = vunpack.c.l.b16 %v285
      %v327 = vunpack.c.l.b16 %v286
      %v328 = vunpack.c.l.b16 %v287
      %v329 = vunpack.c.l.b16 %v288
      %v330 = vunpack.c.l.b16 %v289
      %v331 = vunpack.c.l.b16 %v290
      %v332 = vunpack.c.l.b16 %v291
      %v333 = vunpack.c.l.b16 %v292
      %v334 = vunpack.c.l.b16 %v293
      %v335 = vunpack.c.l.b16 %v294
      %v336 = vunpack.c.l.b16 %v295
      %v337 = vunpack.c.l.b16 %v296
      %v338 = vunpack.c.l.b16 %v297
      %v339 = vunpack.c.l.b16 %v299
      %v340 = vpack.c.b16 %v322, %v321
      %v341 = vpack.c.b16 %v324, %v323
      %v342 = vpack.c.b16 %v326, %v325
      %v343 = vpack.c.b16 %v328, %v327
      %v344 = vpack.c.b16 %v330, %v329
      %v345 = vpack.c.b16 %v332, %v331
      %v346 = vpack.c.b16 %v334, %v333
      %v347 = vpack.c.b16 %v336, %v335
      %v348 = vpack.c.b16 %v338, %v337
      %v349 = vpack.c.b16 %v339, %v339
      %vm350 = vsmask.f32 7424
      %v352 = vshrl.u32 %v340, 16
      %v354 = vshll.u32 %v340, 16
      %v356 = vrot.slane %v354, 1
      %v357 = vor.u32 %v352, %v356
      %v359 = vshll.u32 %v341, 16
      %v361 = vrot.slane %v359, 1
      %v362 = vsel %vm350, %v357, %v361
      %v363 = vshrl.u32 %v341, 16
      %v365 = vor.u32 %v363, %v361
      %v367 = vshll.u32 %v342, 16
      %v369 = vrot.slane %v367, 1
      %v370 = vsel %vm350, %v365, %v369
      %v371 = vshrl.u32 %v342, 16
      %v373 = vor.u32 %v371, %v369
      %v375 = vshll.u32 %v343, 16
      %v377 = vrot.slane %v375, 1
      %v378 = vsel %vm350, %v373, %v377
      %v379 = vshrl.u32 %v343, 16
      %v381 = vor.u32 %v379, %v377
      %v383 = vshll.u32 %v344, 16
      %v385 = vrot.slane %v383, 1
      %v386 = vsel %vm350, %v381, %v385
      %v387 = vshrl.u32 %v344, 16
      %v389 = vor.u32 %v387, %v385
      %v391 = vshll.u32 %v345, 16
      %v393 = vrot.slane %v391, 1
      %v394 = vsel %vm350, %v389, %v393
      %v395 = vshrl.u32 %v345, 16
      %v397 = vor.u32 %v395, %v393
      %v399 = vshll.u32 %v346, 16
      %v401 = vrot.slane %v399, 1
      %v402 = vsel %vm350, %v397, %v401
      %v403 = vshrl.u32 %v346, 16
      %v405 = vor.u32 %v403, %v401
      %v407 = vshll.u32 %v347, 16
      %v409 = vrot.slane %v407, 1
      %v410 = vsel %vm350, %v405, %v409
      %v411 = vshrl.u32 %v347, 16
      %v413 = vor.u32 %v411, %v409
      %v415 = vshll.u32 %v348, 16
      %v417 = vrot.slane %v415, 1
      %v418 = vsel %vm350, %v413, %v417
      %v419 = vshrl.u32 %v348, 16
      %v421 = vor.u32 %v419, %v417
      %v423 = vshll.u32 %v349, 16
      %v425 = vrot.slane %v423, 1
      %v426 = vsel %vm350, %v421, %v425
      %vm427 = vcmask 31744
      %v429 = vsel %vm427, %v362, 0
      %v432 = vsel %vm427, %v370, 0
      %v435 = vsel %vm427, %v378, 0
      %v438 = vsel %vm427, %v386, 0
      %v441 = vsel %vm427, %v394, 0
      %v444 = vsel %vm427, %v402, 0
      %v447 = vsel %vm427, %v410, 0
      %v450 = vsel %vm427, %v418, 0
      %v453 = vsel %vm427, %v426, 0
      %vm455 = vcmask 1041408
      %v457 = vsel %vm455, %v301, 0
      %459 = vmatprep.subr.bf16.mxu0 0
      %460 = vmatpush1.bf16.msra.mxu0 %v457
      %461 = vmatprep.subr.bf16.mxu0 0
      %462 = vmatpush1.bf16.msra.mxu0 0
      %463 = vmatprep.subr.bf16.mxu0 0
      %464 = vmatpush1.bf16.msra.mxu0 0
      %465 = vmatprep.subr.bf16.mxu0 0
      %466 = vmatpush1.bf16.msra.mxu0 0
      %467 = vmatprep.subr.bf16.mxu0 0
      %468 = vmatpush1.bf16.msra.mxu0 0
      %469 = vmatprep.subr.bf16.mxu0 0
      %470 = vmatpush1.bf16.msra.mxu0 0
      %471 = vmatprep.subr.bf16.mxu0 0
      %472 = vmatpush1.bf16.msra.mxu0 0
      %473 = vmatprep.subr.bf16.mxu0 0
      %474 = vmatpush1.bf16.msra.mxu0 0
      %475 = vmatprep.subr.bf16.mxu0 0
      %476 = vmatpush1.bf16.msra.mxu0 0
      %477 = vmatprep.subr.bf16.mxu0 0
      %478 = vmatpush1.bf16.msra.mxu0 0
      %479 = vmatprep.subr.bf16.mxu0 0
      %480 = vmatpush1.bf16.msra.mxu0 0
      %481 = vmatprep.subr.bf16.mxu0 0
      %482 = vmatpush1.bf16.msra.mxu0 0
      %483 = vmatprep.subr.bf16.mxu0 0
      %484 = vmatpush1.bf16.msra.mxu0 0
      %485 = vmatprep.subr.bf16.mxu0 0
      %486 = vmatpush1.bf16.msra.mxu0 0
      %487 = vmatprep.subr.bf16.mxu0 0
      %488 = vmatpush1.bf16.msra.mxu0 0
      %489 = vmatprep.subr.bf16.mxu0 0
      %490 = vmatpush1.bf16.msra.mxu0 0
      %491 = vmatprep.mubr.bf16.mxu0 0
      %492 = vmatmul.mubr.bf16.gmra.mrb[0].mxu0 %v429
      %v493 = vpop.f32.mrb[0].mxu0
      %v494 = vadd.f32 0.0, %v493
      %v495 = vpop.f32.mrb[0].mxu0
      %v496 = vpop.f32.mrb[0].mxu0
      %v497 = vadd.f32 0.0, %v496
      %v498 = vpop.f32.mrb[0].mxu0
      %499 = vmatprep.mubr.bf16.mxu0 0
      %500 = vmatmul.mubr.bf16.gmra.mrb[0].mxu0 %v432
      %v501 = vpop.f32.mrb[0].mxu0
      %v502 = vadd.f32 0.0, %v501
      %v503 = vpop.f32.mrb[0].mxu0
      %v504 = vpop.f32.mrb[0].mxu0
      %v505 = vadd.f32 0.0, %v504
      %v506 = vpop.f32.mrb[0].mxu0
      %507 = vmatprep.mubr.bf16.mxu0 0
      %508 = vmatmul.mubr.bf16.gmra.mrb[0].mxu0 %v435
      %v509 = vpop.f32.mrb[0].mxu0
      %v510 = vadd.f32 0.0, %v509
      %v511 = vpop.f32.mrb[0].mxu0
      %v512 = vpop.f32.mrb[0].mxu0
      %v513 = vadd.f32 0.0, %v512
      %v514 = vpop.f32.mrb[0].mxu0
      %515 = vmatprep.mubr.bf16.mxu0 0
      %516 = vmatmul.mubr.bf16.gmra.mrb[0].mxu0 %v438
      %v517 = vpop.f32.mrb[0].mxu0
      %v518 = vadd.f32 0.0, %v517
      %v519 = vpop.f32.mrb[0].mxu0
      %v520 = vpop.f32.mrb[0].mxu0
      %v521 = vadd.f32 0.0, %v520
      %v522 = vpop.f32.mrb[0].mxu0
      %523 = vmatprep.mubr.bf16.mxu0 0
      %524 = vmatmul.mubr.bf16.gmra.mrb[0].mxu0 %v441
      %v525 = vpop.f32.mrb[0].mxu0
      %v526 = vadd.f32 0.0, %v525
      %v527 = vpop.f32.mrb[0].mxu0
      %v528 = vpop.f32.mrb[0].mxu0
      %v529 = vadd.f32 0.0, %v528
      %v530 = vpop.f32.mrb[0].mxu0
      %531 = vmatprep.mubr.bf16.mxu0 0
      %532 = vmatmul.mubr.bf16.gmra.mrb[0].mxu0 %v444
      %v533 = vpop.f32.mrb[0].mxu0
      %v534 = vadd.f32 0.0, %v533
      %v535 = vpop.f32.mrb[0].mxu0
      %v536 = vpop.f32.mrb[0].mxu0
      %v537 = vadd.f32 0.0, %v536
      %v538 = vpop.f32.mrb[0].mxu0
      %539 = vmatprep.mubr.bf16.mxu0 0
      %540 = vmatmul.mubr.bf16.gmra.mrb[0].mxu0 %v447
      %v541 = vpop.f32.mrb[0].mxu0
      %v542 = vadd.f32 0.0, %v541
      %v543 = vpop.f32.mrb[0].mxu0
      %v544 = vpop.f32.mrb[0].mxu0
      %v545 = vadd.f32 0.0, %v544
      %v546 = vpop.f32.mrb[0].mxu0
      %547 = vmatprep.mubr.bf16.mxu0 0
      %548 = vmatmul.mubr.bf16.gmra.mrb[0].mxu0 %v450
      %v549 = vpop.f32.mrb[0].mxu0
      %v550 = vadd.f32 0.0, %v549
      %v551 = vpop.f32.mrb[0].mxu0
      %v552 = vpop.f32.mrb[0].mxu0
      %v553 = vadd.f32 0.0, %v552
      %v554 = vpop.f32.mrb[0].mxu0
      %555 = vmatprep.mubr.bf16.mxu0 0
      %556 = vmatmul.mubr.bf16.gmra.mrb[0].mxu0 %v453
      %v557 = vpop.f32.mrb[0].mxu0
      %v558 = vadd.f32 0.0, %v557
      %v559 = vpop.f32.mrb[0].mxu0
      %v560 = vpop.f32.mrb[0].mxu0
      %v561 = vadd.f32 0.0, %v560
      %v562 = vpop.f32.mrb[0].mxu0
      %563 = vdwg.mxu0
      %v564 = vsel %vm427, %v340, 0
      %v566 = vsel %vm427, %v341, 0
      %v568 = vsel %vm427, %v342, 0
      %v570 = vsel %vm427, %v343, 0
      %v572 = vsel %vm427, %v344, 0
      %v574 = vsel %vm427, %v345, 0
      %v576 = vsel %vm427, %v346, 0
      %v578 = vsel %vm427, %v347, 0
      %v580 = vsel %vm427, %v348, 0
      %v583 = vsel %vm455, %v298, 0
      %585 = vmatprep.subr.bf16.mxu0 0
      %586 = vmatpush1.bf16.msra.mxu0 %v583
      %587 = vmatprep.subr.bf16.mxu0 0
      %588 = vmatpush1.bf16.msra.mxu0 0
      %589 = vmatprep.subr.bf16.mxu0 0
      %590 = vmatpush1.bf16.msra.mxu0 0
      %591 = vmatprep.subr.bf16.mxu0 0
      %592 = vmatpush1.bf16.msra.mxu0 0
      %593 = vmatprep.subr.bf16.mxu0 0
      %594 = vmatpush1.bf16.msra.mxu0 0
      %595 = vmatprep.subr.bf16.mxu0 0
      %596 = vmatpush1.bf16.msra.mxu0 0
      %597 = vmatprep.subr.bf16.mxu0 0
      %598 = vmatpush1.bf16.msra.mxu0 0
      %599 = vmatprep.subr.bf16.mxu0 0
      %600 = vmatpush1.bf16.msra.mxu0 0
      %601 = vmatprep.subr.bf16.mxu0 0
      %602 = vmatpush1.bf16.msra.mxu0 0
      %603 = vmatprep.subr.bf16.mxu0 0
      %604 = vmatpush1.bf16.msra.mxu0 0
      %605 = vmatprep.subr.bf16.mxu0 0
      %606 = vmatpush1.bf16.msra.mxu0 0
      %607 = vmatprep.subr.bf16.mxu0 0
      %608 = vmatpush1.bf16.msra.mxu0 0
      %609 = vmatprep.subr.bf16.mxu0 0
      %610 = vmatpush1.bf16.msra.mxu0 0
      %611 = vmatprep.subr.bf16.mxu0 0
      %612 = vmatpush1.bf16.msra.mxu0 0
      %613 = vmatprep.subr.bf16.mxu0 0
      %614 = vmatpush1.bf16.msra.mxu0 0
      %615 = vmatprep.subr.bf16.mxu0 0
      %616 = vmatpush1.bf16.msra.mxu0 0
      %617 = vmatprep.mubr.bf16.mxu0 0
      %618 = vmatmul.mubr.bf16.gmra.mrb[0].mxu0 %v564
      %v619 = vpop.f32.mrb[0].mxu0
      %v620 = vadd.f32 %v494, %v619
      %v621 = vpop.f32.mrb[0].mxu0
      %v622 = vpop.f32.mrb[0].mxu0
      %v623 = vadd.f32 %v497, %v622
      %v624 = vpop.f32.mrb[0].mxu0
      %625 = vmatprep.mubr.bf16.mxu0 0
      %626 = vmatmul.mubr.bf16.gmra.mrb[0].mxu0 %v566
      %v627 = vpop.f32.mrb[0].mxu0
      %v628 = vadd.f32 %v502, %v627
      %v629 = vpop.f32.mrb[0].mxu0
      %v630 = vpop.f32.mrb[0].mxu0
      %v631 = vadd.f32 %v505, %v630
      %v632 = vpop.f32.mrb[0].mxu0
      %633 = vmatprep.mubr.bf16.mxu0 0
      %634 = vmatmul.mubr.bf16.gmra.mrb[0].mxu0 %v568
      %v635 = vpop.f32.mrb[0].mxu0
      %v636 = vadd.f32 %v510, %v635
      %v637 = vpop.f32.mrb[0].mxu0
      %v638 = vpop.f32.mrb[0].mxu0
      %v639 = vadd.f32 %v513, %v638
      %v640 = vpop.f32.mrb[0].mxu0
      %641 = vmatprep.mubr.bf16.mxu0 0
      %642 = vmatmul.mubr.bf16.gmra.mrb[0].mxu0 %v570
      %v643 = vpop.f32.mrb[0].mxu0
      %v644 = vadd.f32 %v518, %v643
      %v645 = vpop.f32.mrb[0].mxu0
      %v646 = vpop.f32.mrb[0].mxu0
      %v647 = vadd.f32 %v521, %v646
      %v648 = vpop.f32.mrb[0].mxu0
      %649 = vmatprep.mubr.bf16.mxu0 0
      %650 = vmatmul.mubr.bf16.gmra.mrb[0].mxu0 %v572
      %v651 = vpop.f32.mrb[0].mxu0
      %v652 = vadd.f32 %v526, %v651
      %v653 = vpop.f32.mrb[0].mxu0
      %v654 = vpop.f32.mrb[0].mxu0
      %v655 = vadd.f32 %v529, %v654
      %v656 = vpop.f32.mrb[0].mxu0
      %657 = vmatprep.mubr.bf16.mxu0 0
      %658 = vmatmul.mubr.bf16.gmra.mrb[0].mxu0 %v574
      %v659 = vpop.f32.mrb[0].mxu0
      %v660 = vadd.f32 %v534, %v659
      %v661 = vpop.f32.mrb[0].mxu0
      %v662 = vpop.f32.mrb[0].mxu0
      %v663 = vadd.f32 %v537, %v662
      %v664 = vpop.f32.mrb[0].mxu0
      %665 = vmatprep.mubr.bf16.mxu0 0
      %666 = vmatmul.mubr.bf16.gmra.mrb[0].mxu0 %v576
      %v667 = vpop.f32.mrb[0].mxu0
      %v668 = vadd.f32 %v542, %v667
      %v669 = vpop.f32.mrb[0].mxu0
      %v670 = vpop.f32.mrb[0].mxu0
      %v671 = vadd.f32 %v545, %v670
      %v672 = vpop.f32.mrb[0].mxu0
      %673 = vmatprep.mubr.bf16.mxu0 0
      %674 = vmatmul.mubr.bf16.gmra.mrb[0].mxu0 %v578
      %v675 = vpop.f32.mrb[0].mxu0
      %v676 = vadd.f32 %v550, %v675
      %v677 = vpop.f32.mrb[0].mxu0
      %v678 = vpop.f32.mrb[0].mxu0
      %v679 = vadd.f32 %v553, %v678
      %v680 = vpop.f32.mrb[0].mxu0
      %681 = vmatprep.mubr.bf16.mxu0 0
      %682 = vmatmul.mubr.bf16.gmra.mrb[0].mxu0 %v580
      %v683 = vpop.f32.mrb[0].mxu0
      %v684 = vadd.f32 %v558, %v683
      %v685 = vpop.f32.mrb[0].mxu0
      %v686 = vpop.f32.mrb[0].mxu0
      %v687 = vadd.f32 %v561, %v686
      %v688 = vpop.f32.mrb[0].mxu0
      %689 = vdwg.mxu0
      %v690 = vld [vmem:[%s270] sm:$0xe]
      %s691 = scalar_lea.vmem %s1, 4
      %v692 = vld [vmem:[%s691] sm:$0x3]
      %v694 = vunpack.c.l.b16 %v690
      %v695 = vpack.c.b16 %v322, %v694
      %vm696 = vcmask 1046528
      %v697 = vrot.slane %v695, 1
      %v698 = vrot.slane %v341, 1
      %v699 = vsel %vm696, %v697, %v698
      %v700 = vrot.slane %v342, 1
      %v701 = vsel %vm696, %v698, %v700
      %v702 = vrot.slane %v343, 1
      %v703 = vsel %vm696, %v700, %v702
      %v704 = vrot.slane %v344, 1
      %v705 = vsel %vm696, %v702, %v704
      %v706 = vrot.slane %v345, 1
      %v707 = vsel %vm696, %v704, %v706
      %v708 = vrot.slane %v346, 1
      %v709 = vsel %vm696, %v706, %v708
      %v710 = vrot.slane %v347, 1
      %v711 = vsel %vm696, %v708, %v710
      %v712 = vrot.slane %v348, 1
      %v713 = vsel %vm696, %v710, %v712
      %v714 = vrot.slane %v349, 1
      %v715 = vsel %vm696, %v712, %v714
      %v717 = vsel %vm427, %v699, 0
      %v720 = vsel %vm427, %v701, 0
      %v723 = vsel %vm427, %v703, 0
      %v726 = vsel %vm427, %v705, 0
      %v729 = vsel %vm427, %v707, 0
      %v732 = vsel %vm427, %v709, 0
      %v735 = vsel %vm427, %v711, 0
      %v738 = vsel %vm427, %v713, 0
      %v741 = vsel %vm427, %v715, 0
      %v744 = vsel %vm455, %v692, 0
      %746 = vmatprep.subr.bf16.mxu0 0
      %747 = vmatpush1.bf16.msra.mxu0 %v744
      %748 = vmatprep.subr.bf16.mxu0 0
      %749 = vmatpush1.bf16.msra.mxu0 0
      %750 = vmatprep.subr.bf16.mxu0 0
      %751 = vmatpush1.bf16.msra.mxu0 0
      %752 = vmatprep.subr.bf16.mxu0 0
      %753 = vmatpush1.bf16.msra.mxu0 0
      %754 = vmatprep.subr.bf16.mxu0 0
      %755 = vmatpush1.bf16.msra.mxu0 0
      %756 = vmatprep.subr.bf16.mxu0 0
      %757 = vmatpush1.bf16.msra.mxu0 0
      %758 = vmatprep.subr.bf16.mxu0 0
      %759 = vmatpush1.bf16.msra.mxu0 0
      %760 = vmatprep.subr.bf16.mxu0 0
      %761 = vmatpush1.bf16.msra.mxu0 0
      %762 = vmatprep.subr.bf16.mxu0 0
      %763 = vmatpush1.bf16.msra.mxu0 0
      %764 = vmatprep.subr.bf16.mxu0 0
      %765 = vmatpush1.bf16.msra.mxu0 0
      %766 = vmatprep.subr.bf16.mxu0 0
      %767 = vmatpush1.bf16.msra.mxu0 0
      %768 = vmatprep.subr.bf16.mxu0 0
      %769 = vmatpush1.bf16.msra.mxu0 0
      %770 = vmatprep.subr.bf16.mxu0 0
      %771 = vmatpush1.bf16.msra.mxu0 0
      %772 = vmatprep.subr.bf16.mxu0 0
      %773 = vmatpush1.bf16.msra.mxu0 0
      %774 = vmatprep.subr.bf16.mxu0 0
      %775 = vmatpush1.bf16.msra.mxu0 0
      %776 = vmatprep.subr.bf16.mxu0 0
      %777 = vmatpush1.bf16.msra.mxu0 0
      %778 = vmatprep.mubr.bf16.mxu0 0
      %779 = vmatmul.mubr.bf16.gmra.mrb[0].mxu0 %v717
      %v780 = vpop.f32.mrb[0].mxu0
      %v781 = vadd.f32 0.0, %v780
      %v782 = vpop.f32.mrb[0].mxu0
      %v783 = vpop.f32.mrb[0].mxu0
      %v784 = vadd.f32 0.0, %v783
      %v785 = vpop.f32.mrb[0].mxu0
      %786 = vmatprep.mubr.bf16.mxu0 0
      %787 = vmatmul.mubr.bf16.gmra.mrb[0].mxu0 %v720
      %v788 = vpop.f32.mrb[0].mxu0
      %v789 = vadd.f32 0.0, %v788
      %v790 = vpop.f32.mrb[0].mxu0
      %v791 = vpop.f32.mrb[0].mxu0
      %v792 = vadd.f32 0.0, %v791
      %v793 = vpop.f32.mrb[0].mxu0
      %794 = vmatprep.mubr.bf16.mxu0 0
      %795 = vmatmul.mubr.bf16.gmra.mrb[0].mxu0 %v723
      %v796 = vpop.f32.mrb[0].mxu0
      %v797 = vadd.f32 0.0, %v796
      %v798 = vpop.f32.mrb[0].mxu0
      %v799 = vpop.f32.mrb[0].mxu0
      %v800 = vadd.f32 0.0, %v799
      %v801 = vpop.f32.mrb[0].mxu0
      %802 = vmatprep.mubr.bf16.mxu0 0
      %803 = vmatmul.mubr.bf16.gmra.mrb[0].mxu0 %v726
      %v804 = vpop.f32.mrb[0].mxu0
      %v805 = vadd.f32 0.0, %v804
      %v806 = vpop.f32.mrb[0].mxu0
      %v807 = vpop.f32.mrb[0].mxu0
      %v808 = vadd.f32 0.0, %v807
      %v809 = vpop.f32.mrb[0].mxu0
      %810 = vmatprep.mubr.bf16.mxu0 0
      %811 = vmatmul.mubr.bf16.gmra.mrb[0].mxu0 %v729
      %v812 = vpop.f32.mrb[0].mxu0
      %v813 = vadd.f32 0.0, %v812
      %v814 = vpop.f32.mrb[0].mxu0
      %v815 = vpop.f32.mrb[0].mxu0
      %v816 = vadd.f32 0.0, %v815
      %v817 = vpop.f32.mrb[0].mxu0
      %818 = vmatprep.mubr.bf16.mxu0 0
      %819 = vmatmul.mubr.bf16.gmra.mrb[0].mxu0 %v732
      %v820 = vpop.f32.mrb[0].mxu0
      %v821 = vadd.f32 0.0, %v820
      %v822 = vpop.f32.mrb[0].mxu0
      %v823 = vpop.f32.mrb[0].mxu0
      %v824 = vadd.f32 0.0, %v823
      %v825 = vpop.f32.mrb[0].mxu0
      %826 = vmatprep.mubr.bf16.mxu0 0
      %827 = vmatmul.mubr.bf16.gmra.mrb[0].mxu0 %v735
      %v828 = vpop.f32.mrb[0].mxu0
      %v829 = vadd.f32 0.0, %v828
      %v830 = vpop.f32.mrb[0].mxu0
      %v831 = vpop.f32.mrb[0].mxu0
      %v832 = vadd.f32 0.0, %v831
      %v833 = vpop.f32.mrb[0].mxu0
      %834 = vmatprep.mubr.bf16.mxu0 0
      %835 = vmatmul.mubr.bf16.gmra.mrb[0].mxu0 %v738
      %v836 = vpop.f32.mrb[0].mxu0
      %v837 = vadd.f32 0.0, %v836
      %v838 = vpop.f32.mrb[0].mxu0
      %v839 = vpop.f32.mrb[0].mxu0
      %v840 = vadd.f32 0.0, %v839
      %v841 = vpop.f32.mrb[0].mxu0
      %842 = vmatprep.mubr.bf16.mxu0 0
      %843 = vmatmul.mubr.bf16.gmra.mrb[0].mxu0 %v741
      %v844 = vpop.f32.mrb[0].mxu0
      %v845 = vadd.f32 0.0, %v844
      %v846 = vpop.f32.mrb[0].mxu0
      %v847 = vpop.f32.mrb[0].mxu0
      %v848 = vadd.f32 0.0, %v847
      %v849 = vpop.f32.mrb[0].mxu0
      %850 = vdwg.mxu0
      %v851 = vadd.f32 %v620, %v781
      %v852 = vadd.f32 %v623, %v784
      %v853 = vadd.f32 %v628, %v789
      %v854 = vadd.f32 %v631, %v792
      %v855 = vadd.f32 %v636, %v797
      %v856 = vadd.f32 %v639, %v800
      %v857 = vadd.f32 %v644, %v805
      %v858 = vadd.f32 %v647, %v808
      %v859 = vadd.f32 %v652, %v813
      %v860 = vadd.f32 %v655, %v816
      %v861 = vadd.f32 %v660, %v821
      %v862 = vadd.f32 %v663, %v824
      %v863 = vadd.f32 %v668, %v829
      %v864 = vadd.f32 %v671, %v832
      %v865 = vadd.f32 %v676, %v837
      %v866 = vadd.f32 %v679, %v840
      %v867 = vadd.f32 %v684, %v845
      %v868 = vadd.f32 %v687, %v848
      %v869 = vld [vmem:[%s270 + $0x8] sm:$0xe]
      %v870 = vld [vmem:[%s270 + $0xc] sm:$0xf]
      %v871 = vld [vmem:[%s270 + $0x10] sm:$0xf]
      %v872 = vld [vmem:[%s270 + $0x14] sm:$0xf]
      %v873 = vld [vmem:[%s270 + $0x18] sm:$0xf]
      %v874 = vld [vmem:[%s270 + $0x1c] sm:$0xf]
      %v875 = vld [vmem:[%s270 + $0x20] sm:$0xf]
      %v876 = vld [vmem:[%s270 + $0x24] sm:$0xf]
      %v877 = vld [vmem:[%s270 + $0x28] sm:$0xf]
      %v878 = vld [vmem:[%s270 + $0x2c] sm:$0xf]
      %v879 = vld [vmem:[%s270 + $0x30] sm:$0xf]
      %v880 = vld [vmem:[%s270 + $0x34] sm:$0xf]
      %v881 = vld [vmem:[%s270 + $0x38] sm:$0xf]
      %v882 = vld [vmem:[%s270 + $0x3c] sm:$0xf]
      %v883 = vld [vmem:[%s270 + $0x40] sm:$0xf]
      %v884 = vld [vmem:[%s270 + $0x44] sm:$0xf]
      %v885 = vld [vmem:[%s270 + $0x48] sm:$0xf]
      %v886 = vld [vmem:[%s270 + $0x4c] sm:$0xf]
      %v887 = vld [vmem:[%s270 + $0x50] sm:$0x1]
      %s888 = scalar_lea.vmem %s1, 6
      %v889 = vld [vmem:[%s888] sm:$0x3]
      %v909 = vunpack.c.l.b16 %v869
      %v910 = vunpack.c.l.b16 %v870
      %v911 = vunpack.c.l.b16 %v871
      %v912 = vunpack.c.l.b16 %v872
      %v913 = vunpack.c.l.b16 %v873
      %v914 = vunpack.c.l.b16 %v874
      %v915 = vunpack.c.l.b16 %v875
      %v916 = vunpack.c.l.b16 %v876
      %v917 = vunpack.c.l.b16 %v877
      %v918 = vunpack.c.l.b16 %v878
      %v919 = vunpack.c.l.b16 %v879
      %v920 = vunpack.c.l.b16 %v880
      %v921 = vunpack.c.l.b16 %v881
      %v922 = vunpack.c.l.b16 %v882
      %v923 = vunpack.c.l.b16 %v883
      %v924 = vunpack.c.l.b16 %v884
      %v925 = vunpack.c.l.b16 %v885
      %v926 = vunpack.c.l.b16 %v886
      %v927 = vunpack.c.l.b16 %v887
      %v928 = vpack.c.b16 %v910, %v909
      %v929 = vpack.c.b16 %v912, %v911
      %v930 = vpack.c.b16 %v914, %v913
      %v931 = vpack.c.b16 %v916, %v915
      %v932 = vpack.c.b16 %v918, %v917
      %v933 = vpack.c.b16 %v920, %v919
      %v934 = vpack.c.b16 %v922, %v921
      %v935 = vpack.c.b16 %v924, %v923
      %v936 = vpack.c.b16 %v926, %v925
      %v937 = vpack.c.b16 %v927, %v927
      %v938 = vrot.slane %v928, 1
      %v939 = vrot.slane %v929, 1
      %v940 = vsel %vm696, %v938, %v939
      %v941 = vrot.slane %v930, 1
      %v942 = vsel %vm696, %v939, %v941
      %v943 = vrot.slane %v931, 1
      %v944 = vsel %vm696, %v941, %v943
      %v945 = vrot.slane %v932, 1
      %v946 = vsel %vm696, %v943, %v945
      %v947 = vrot.slane %v933, 1
      %v948 = vsel %vm696, %v945, %v947
      %v949 = vrot.slane %v934, 1
      %v950 = vsel %vm696, %v947, %v949
      %v951 = vrot.slane %v935, 1
      %v952 = vsel %vm696, %v949, %v951
      %v953 = vrot.slane %v936, 1
      %v954 = vsel %vm696, %v951, %v953
      %v955 = vrot.slane %v937, 1
      %v956 = vsel %vm696, %v953, %v955
      %v958 = vsel %vm427, %v940, 0
      %v961 = vsel %vm427, %v942, 0
      %v964 = vsel %vm427, %v944, 0
      %v967 = vsel %vm427, %v946, 0
      %v970 = vsel %vm427, %v948, 0
      %v973 = vsel %vm427, %v950, 0
      %v976 = vsel %vm427, %v952, 0
      %v979 = vsel %vm427, %v954, 0
      %v982 = vsel %vm427, %v956, 0
      %v985 = vsel %vm455, %v889, 0
      %987 = vmatprep.subr.bf16.mxu0 0
      %988 = vmatpush1.bf16.msra.mxu0 %v985
      %989 = vmatprep.subr.bf16.mxu0 0
      %990 = vmatpush1.bf16.msra.mxu0 0
      %991 = vmatprep.subr.bf16.mxu0 0
      %992 = vmatpush1.bf16.msra.mxu0 0
      %993 = vmatprep.subr.bf16.mxu0 0
      %994 = vmatpush1.bf16.msra.mxu0 0
      %995 = vmatprep.subr.bf16.mxu0 0
      %996 = vmatpush1.bf16.msra.mxu0 0
      %997 = vmatprep.subr.bf16.mxu0 0
      %998 = vmatpush1.bf16.msra.mxu0 0
      %999 = vmatprep.subr.bf16.mxu0 0
      %1000 = vmatpush1.bf16.msra.mxu0 0
      %1001 = vmatprep.subr.bf16.mxu0 0
      %1002 = vmatpush1.bf16.msra.mxu0 0
      %1003 = vmatprep.subr.bf16.mxu0 0
      %1004 = vmatpush1.bf16.msra.mxu0 0
      %1005 = vmatprep.subr.bf16.mxu0 0
      %1006 = vmatpush1.bf16.msra.mxu0 0
      %1007 = vmatprep.subr.bf16.mxu0 0
      %1008 = vmatpush1.bf16.msra.mxu0 0
      %1009 = vmatprep.subr.bf16.mxu0 0
      %1010 = vmatpush1.bf16.msra.mxu0 0
      %1011 = vmatprep.subr.bf16.mxu0 0
      %1012 = vmatpush1.bf16.msra.mxu0 0
      %1013 = vmatprep.subr.bf16.mxu0 0
      %1014 = vmatpush1.bf16.msra.mxu0 0
      %1015 = vmatprep.subr.bf16.mxu0 0
      %1016 = vmatpush1.bf16.msra.mxu0 0
      %1017 = vmatprep.subr.bf16.mxu0 0
      %1018 = vmatpush1.bf16.msra.mxu0 0
      %1019 = vmatprep.mubr.bf16.mxu0 0
      %1020 = vmatmul.mubr.bf16.gmra.mrb[0].mxu0 %v958
      %v1021 = vpop.f32.mrb[0].mxu0
      %v1022 = vadd.f32 0.0, %v1021
      %v1023 = vpop.f32.mrb[0].mxu0
      %v1024 = vpop.f32.mrb[0].mxu0
      %v1025 = vadd.f32 0.0, %v1024
      %v1026 = vpop.f32.mrb[0].mxu0
      %1027 = vmatprep.mubr.bf16.mxu0 0
      %1028 = vmatmul.mubr.bf16.gmra.mrb[0].mxu0 %v961
      %v1029 = vpop.f32.mrb[0].mxu0
      %v1030 = vadd.f32 0.0, %v1029
      %v1031 = vpop.f32.mrb[0].mxu0
      %v1032 = vpop.f32.mrb[0].mxu0
      %v1033 = vadd.f32 0.0, %v1032
      %v1034 = vpop.f32.mrb[0].mxu0
      %1035 = vmatprep.mubr.bf16.mxu0 0
      %1036 = vmatmul.mubr.bf16.gmra.mrb[0].mxu0 %v964
      %v1037 = vpop.f32.mrb[0].mxu0
      %v1038 = vadd.f32 0.0, %v1037
      %v1039 = vpop.f32.mrb[0].mxu0
      %v1040 = vpop.f32.mrb[0].mxu0
      %v1041 = vadd.f32 0.0, %v1040
      %v1042 = vpop.f32.mrb[0].mxu0
      %1043 = vmatprep.mubr.bf16.mxu0 0
      %1044 = vmatmul.mubr.bf16.gmra.mrb[0].mxu0 %v967
      %v1045 = vpop.f32.mrb[0].mxu0
      %v1046 = vadd.f32 0.0, %v1045
      %v1047 = vpop.f32.mrb[0].mxu0
      %v1048 = vpop.f32.mrb[0].mxu0
      %v1049 = vadd.f32 0.0, %v1048
      %v1050 = vpop.f32.mrb[0].mxu0
      %1051 = vmatprep.mubr.bf16.mxu0 0
      %1052 = vmatmul.mubr.bf16.gmra.mrb[0].mxu0 %v970
      %v1053 = vpop.f32.mrb[0].mxu0
      %v1054 = vadd.f32 0.0, %v1053
      %v1055 = vpop.f32.mrb[0].mxu0
      %v1056 = vpop.f32.mrb[0].mxu0
      %v1057 = vadd.f32 0.0, %v1056
      %v1058 = vpop.f32.mrb[0].mxu0
      %1059 = vmatprep.mubr.bf16.mxu0 0
      %1060 = vmatmul.mubr.bf16.gmra.mrb[0].mxu0 %v973
      %v1061 = vpop.f32.mrb[0].mxu0
      %v1062 = vadd.f32 0.0, %v1061
      %v1063 = vpop.f32.mrb[0].mxu0
      %v1064 = vpop.f32.mrb[0].mxu0
      %v1065 = vadd.f32 0.0, %v1064
      %v1066 = vpop.f32.mrb[0].mxu0
      %1067 = vmatprep.mubr.bf16.mxu0 0
      %1068 = vmatmul.mubr.bf16.gmra.mrb[0].mxu0 %v976
      %v1069 = vpop.f32.mrb[0].mxu0
      %v1070 = vadd.f32 0.0, %v1069
      %v1071 = vpop.f32.mrb[0].mxu0
      %v1072 = vpop.f32.mrb[0].mxu0
      %v1073 = vadd.f32 0.0, %v1072
      %v1074 = vpop.f32.mrb[0].mxu0
      %1075 = vmatprep.mubr.bf16.mxu0 0
      %1076 = vmatmul.mubr.bf16.gmra.mrb[0].mxu0 %v979
      %v1077 = vpop.f32.mrb[0].mxu0
      %v1078 = vadd.f32 0.0, %v1077
      %v1079 = vpop.f32.mrb[0].mxu0
      %v1080 = vpop.f32.mrb[0].mxu0
      %v1081 = vadd.f32 0.0, %v1080
      %v1082 = vpop.f32.mrb[0].mxu0
      %1083 = vmatprep.mubr.bf16.mxu0 0
      %1084 = vmatmul.mubr.bf16.gmra.mrb[0].mxu0 %v982
      %v1085 = vpop.f32.mrb[0].mxu0
      %v1086 = vadd.f32 0.0, %v1085
      %v1087 = vpop.f32.mrb[0].mxu0
      %v1088 = vpop.f32.mrb[0].mxu0
      %v1089 = vadd.f32 0.0, %v1088
      %v1090 = vpop.f32.mrb[0].mxu0
      %1091 = vdwg.mxu0
      %v1092 = vadd.f32 %v851, %v1022
      %v1093 = vadd.f32 %v852, %v1025
      %v1094 = vadd.f32 %v853, %v1030
      %v1095 = vadd.f32 %v854, %v1033
      %v1096 = vadd.f32 %v855, %v1038
      %v1097 = vadd.f32 %v856, %v1041
      %v1098 = vadd.f32 %v857, %v1046
      %v1099 = vadd.f32 %v858, %v1049
      %v1100 = vadd.f32 %v859, %v1054
      %v1101 = vadd.f32 %v860, %v1057
      %v1102 = vadd.f32 %v861, %v1062
      %v1103 = vadd.f32 %v862, %v1065
      %v1104 = vadd.f32 %v863, %v1070
      %v1105 = vadd.f32 %v864, %v1073
      %v1106 = vadd.f32 %v865, %v1078
      %v1107 = vadd.f32 %v866, %v1081
      %v1108 = vadd.f32 %v867, %v1086
      %v1109 = vadd.f32 %v868, %v1089
      %v1110 = vld [vmem:[%s270 + $0x50] sm:$0x3]
      %s1111 = scalar_lea.vmem %s1, 8
      %v1112 = vld [vmem:[%s1111] sm:$0x3]
      %v1114 = vunpack.c.l.b16 %v1110
      %v1115 = vpack.c.b16 %v1114, %v1114
      %vm1116 = vsmask.f32 6400
      %v1118 = vshrl.u32 %v928, 16
      %v1120 = vrot.slane %v1118, 1
      %v1121 = vshll.u32 %v928, 16
      %v1123 = vrot.slane %v1121, 2
      %v1124 = vor.u32 %v1120, %v1123
      %v1126 = vshrl.u32 %v929, 16
      %v1128 = vrot.slane %v1126, 1
      %v1129 = vshll.u32 %v929, 16
      %v1131 = vrot.slane %v1129, 2
      %v1132 = vor.u32 %v1128, %v1131
      %v1133 = vsel %vm1116, %v1124, %v1132
      %v1135 = vshrl.u32 %v930, 16
      %v1137 = vrot.slane %v1135, 1
      %v1138 = vshll.u32 %v930, 16
      %v1140 = vrot.slane %v1138, 2
      %v1141 = vor.u32 %v1137, %v1140
      %v1142 = vsel %vm1116, %v1132, %v1141
      %v1144 = vshrl.u32 %v931, 16
      %v1146 = vrot.slane %v1144, 1
      %v1147 = vshll.u32 %v931, 16
      %v1149 = vrot.slane %v1147, 2
      %v1150 = vor.u32 %v1146, %v1149
      %v1151 = vsel %vm1116, %v1141, %v1150
      %v1153 = vshrl.u32 %v932, 16
      %v1155 = vrot.slane %v1153, 1
      %v1156 = vshll.u32 %v932, 16
      %v1158 = vrot.slane %v1156, 2
      %v1159 = vor.u32 %v1155, %v1158
      %v1160 = vsel %vm1116, %v1150, %v1159
      %v1162 = vshrl.u32 %v933, 16
      %v1164 = vrot.slane %v1162, 1
      %v1165 = vshll.u32 %v933, 16
      %v1167 = vrot.slane %v1165, 2
      %v1168 = vor.u32 %v1164, %v1167
      %v1169 = vsel %vm1116, %v1159, %v1168
      %v1171 = vshrl.u32 %v934, 16
      %v1173 = vrot.slane %v1171, 1
      %v1174 = vshll.u32 %v934, 16
      %v1176 = vrot.slane %v1174, 2
      %v1177 = vor.u32 %v1173, %v1176
      %v1178 = vsel %vm1116, %v1168, %v1177
      %v1180 = vshrl.u32 %v935, 16
      %v1182 = vrot.slane %v1180, 1
      %v1183 = vshll.u32 %v935, 16
      %v1185 = vrot.slane %v1183, 2
      %v1186 = vor.u32 %v1182, %v1185
      %v1187 = vsel %vm1116, %v1177, %v1186
      %v1189 = vshrl.u32 %v936, 16
      %v1191 = vrot.slane %v1189, 1
      %v1192 = vshll.u32 %v936, 16
      %v1194 = vrot.slane %v1192, 2
      %v1195 = vor.u32 %v1191, %v1194
      %v1196 = vsel %vm1116, %v1186, %v1195
      %v1198 = vshrl.u32 %v1115, 16
      %v1200 = vrot.slane %v1198, 1
      %v1201 = vshll.u32 %v1115, 16
      %v1203 = vrot.slane %v1201, 2
      %v1204 = vor.u32 %v1200, %v1203
      %v1205 = vsel %vm1116, %v1195, %v1204
      %v1207 = vsel %vm427, %v1133, 0
      %v1210 = vsel %vm427, %v1142, 0
      %v1213 = vsel %vm427, %v1151, 0
      %v1216 = vsel %vm427, %v1160, 0
      %v1219 = vsel %vm427, %v1169, 0
      %v1222 = vsel %vm427, %v1178, 0
      %v1225 = vsel %vm427, %v1187, 0
      %v1228 = vsel %vm427, %v1196, 0
      %v1231 = vsel %vm427, %v1205, 0
      %v1234 = vsel %vm455, %v1112, 0
      %1236 = vmatprep.subr.bf16.mxu0 0
      %1237 = vmatpush1.bf16.msra.mxu0 %v1234
      %1238 = vmatprep.subr.bf16.mxu0 0
      %1239 = vmatpush1.bf16.msra.mxu0 0
      %1240 = vmatprep.subr.bf16.mxu0 0
      %1241 = vmatpush1.bf16.msra.mxu0 0
      %1242 = vmatprep.subr.bf16.mxu0 0
      %1243 = vmatpush1.bf16.msra.mxu0 0
      %1244 = vmatprep.subr.bf16.mxu0 0
      %1245 = vmatpush1.bf16.msra.mxu0 0
      %1246 = vmatprep.subr.bf16.mxu0 0
      %1247 = vmatpush1.bf16.msra.mxu0 0
      %1248 = vmatprep.subr.bf16.mxu0 0
      %1249 = vmatpush1.bf16.msra.mxu0 0
      %1250 = vmatprep.subr.bf16.mxu0 0
      %1251 = vmatpush1.bf16.msra.mxu0 0
      %1252 = vmatprep.subr.bf16.mxu0 0
      %1253 = vmatpush1.bf16.msra.mxu0 0
      %1254 = vmatprep.subr.bf16.mxu0 0
      %1255 = vmatpush1.bf16.msra.mxu0 0
      %1256 = vmatprep.subr.bf16.mxu0 0
      %1257 = vmatpush1.bf16.msra.mxu0 0
      %1258 = vmatprep.subr.bf16.mxu0 0
      %1259 = vmatpush1.bf16.msra.mxu0 0
      %1260 = vmatprep.subr.bf16.mxu0 0
      %1261 = vmatpush1.bf16.msra.mxu0 0
      %1262 = vmatprep.subr.bf16.mxu0 0
      %1263 = vmatpush1.bf16.msra.mxu0 0
      %1264 = vmatprep.subr.bf16.mxu0 0
      %1265 = vmatpush1.bf16.msra.mxu0 0
      %1266 = vmatprep.subr.bf16.mxu0 0
      %1267 = vmatpush1.bf16.msra.mxu0 0
      %1268 = vmatprep.mubr.bf16.mxu0 0
      %1269 = vmatmul.mubr.bf16.gmra.mrb[0].mxu0 %v1207
      %v1270 = vpop.f32.mrb[0].mxu0
      %v1271 = vadd.f32 0.0, %v1270
      %v1272 = vpop.f32.mrb[0].mxu0
      %v1273 = vpop.f32.mrb[0].mxu0
      %v1274 = vadd.f32 0.0, %v1273
      %v1275 = vpop.f32.mrb[0].mxu0
      %1276 = vmatprep.mubr.bf16.mxu0 0
      %1277 = vmatmul.mubr.bf16.gmra.mrb[0].mxu0 %v1210
      %v1278 = vpop.f32.mrb[0].mxu0
      %v1279 = vadd.f32 0.0, %v1278
      %v1280 = vpop.f32.mrb[0].mxu0
      %v1281 = vpop.f32.mrb[0].mxu0
      %v1282 = vadd.f32 0.0, %v1281
      %v1283 = vpop.f32.mrb[0].mxu0
      %1284 = vmatprep.mubr.bf16.mxu0 0
      %1285 = vmatmul.mubr.bf16.gmra.mrb[0].mxu0 %v1213
      %v1286 = vpop.f32.mrb[0].mxu0
      %v1287 = vadd.f32 0.0, %v1286
      %v1288 = vpop.f32.mrb[0].mxu0
      %v1289 = vpop.f32.mrb[0].mxu0
      %v1290 = vadd.f32 0.0, %v1289
      %v1291 = vpop.f32.mrb[0].mxu0
      %1292 = vmatprep.mubr.bf16.mxu0 0
      %1293 = vmatmul.mubr.bf16.gmra.mrb[0].mxu0 %v1216
      %v1294 = vpop.f32.mrb[0].mxu0
      %v1295 = vadd.f32 0.0, %v1294
      %v1296 = vpop.f32.mrb[0].mxu0
      %v1297 = vpop.f32.mrb[0].mxu0
      %v1298 = vadd.f32 0.0, %v1297
      %v1299 = vpop.f32.mrb[0].mxu0
      %1300 = vmatprep.mubr.bf16.mxu0 0
      %1301 = vmatmul.mubr.bf16.gmra.mrb[0].mxu0 %v1219
      %v1302 = vpop.f32.mrb[0].mxu0
      %v1303 = vadd.f32 0.0, %v1302
      %v1304 = vpop.f32.mrb[0].mxu0
      %v1305 = vpop.f32.mrb[0].mxu0
      %v1306 = vadd.f32 0.0, %v1305
      %v1307 = vpop.f32.mrb[0].mxu0
      %1308 = vmatprep.mubr.bf16.mxu0 0
      %1309 = vmatmul.mubr.bf16.gmra.mrb[0].mxu0 %v1222
      %v1310 = vpop.f32.mrb[0].mxu0
      %v1311 = vadd.f32 0.0, %v1310
      %v1312 = vpop.f32.mrb[0].mxu0
      %v1313 = vpop.f32.mrb[0].mxu0
      %v1314 = vadd.f32 0.0, %v1313
      %v1315 = vpop.f32.mrb[0].mxu0
      %1316 = vmatprep.mubr.bf16.mxu0 0
      %1317 = vmatmul.mubr.bf16.gmra.mrb[0].mxu0 %v1225
      %v1318 = vpop.f32.mrb[0].mxu0
      %v1319 = vadd.f32 0.0, %v1318
      %v1320 = vpop.f32.mrb[0].mxu0
      %v1321 = vpop.f32.mrb[0].mxu0
      %v1322 = vadd.f32 0.0, %v1321
      %v1323 = vpop.f32.mrb[0].mxu0
      %1324 = vmatprep.mubr.bf16.mxu0 0
      %1325 = vmatmul.mubr.bf16.gmra.mrb[0].mxu0 %v1228
      %v1326 = vpop.f32.mrb[0].mxu0
      %v1327 = vadd.f32 0.0, %v1326
      %v1328 = vpop.f32.mrb[0].mxu0
      %v1329 = vpop.f32.mrb[0].mxu0
      %v1330 = vadd.f32 0.0, %v1329
      %v1331 = vpop.f32.mrb[0].mxu0
      %1332 = vmatprep.mubr.bf16.mxu0 0
      %1333 = vmatmul.mubr.bf16.gmra.mrb[0].mxu0 %v1231
      %v1334 = vpop.f32.mrb[0].mxu0
      %v1335 = vadd.f32 0.0, %v1334
      %v1336 = vpop.f32.mrb[0].mxu0
      %v1337 = vpop.f32.mrb[0].mxu0
      %v1338 = vadd.f32 0.0, %v1337
      %v1339 = vpop.f32.mrb[0].mxu0
      %1340 = vdwg.mxu0
      %v1341 = vadd.f32 %v1092, %v1271
      %v1342 = vadd.f32 %v1093, %v1274
      %v1343 = vadd.f32 %v1094, %v1279
      %v1344 = vadd.f32 %v1095, %v1282
      %v1345 = vadd.f32 %v1096, %v1287
      %v1346 = vadd.f32 %v1097, %v1290
      %v1347 = vadd.f32 %v1098, %v1295
      %v1348 = vadd.f32 %v1099, %v1298
      %v1349 = vadd.f32 %v1100, %v1303
      %v1350 = vadd.f32 %v1101, %v1306
      %v1351 = vadd.f32 %v1102, %v1311
      %v1352 = vadd.f32 %v1103, %v1314
      %v1353 = vadd.f32 %v1104, %v1319
      %v1354 = vadd.f32 %v1105, %v1322
      %v1355 = vadd.f32 %v1106, %v1327
      %v1356 = vadd.f32 %v1107, %v1330
      %v1357 = vadd.f32 %v1108, %v1335
      %v1358 = vadd.f32 %v1109, %v1338
      %v1359 = vld [vmem:[%s270 + $0x8] sm:$0xc]
      %s1360 = scalar_lea.vmem %s1, 10
      %v1361 = vld [vmem:[%s1360] sm:$0x3]
      %v1363 = vunpack.c.l.b16 %v1359
      %v1364 = vpack.c.b16 %v910, %v1363
      %vm1365 = vcmask 1045504
      %v1366 = vrot.slane %v1364, 2
      %v1367 = vrot.slane %v929, 2
      %v1368 = vsel %vm1365, %v1366, %v1367
      %v1369 = vrot.slane %v930, 2
      %v1370 = vsel %vm1365, %v1367, %v1369
      %v1371 = vrot.slane %v931, 2
      %v1372 = vsel %vm1365, %v1369, %v1371
      %v1373 = vrot.slane %v932, 2
      %v1374 = vsel %vm1365, %v1371, %v1373
      %v1375 = vrot.slane %v933, 2
      %v1376 = vsel %vm1365, %v1373, %v1375
      %v1377 = vrot.slane %v934, 2
      %v1378 = vsel %vm1365, %v1375, %v1377
      %v1379 = vrot.slane %v935, 2
      %v1380 = vsel %vm1365, %v1377, %v1379
      %v1381 = vrot.slane %v936, 2
      %v1382 = vsel %vm1365, %v1379, %v1381
      %v1383 = vrot.slane %v1115, 2
      %v1384 = vsel %vm1365, %v1381, %v1383
      %v1386 = vsel %vm427, %v1368, 0
      %v1389 = vsel %vm427, %v1370, 0
      %v1392 = vsel %vm427, %v1372, 0
      %v1395 = vsel %vm427, %v1374, 0
      %v1398 = vsel %vm427, %v1376, 0
      %v1401 = vsel %vm427, %v1378, 0
      %v1404 = vsel %vm427, %v1380, 0
      %v1407 = vsel %vm427, %v1382, 0
      %v1410 = vsel %vm427, %v1384, 0
      %v1413 = vsel %vm455, %v1361, 0
      %1415 = vmatprep.subr.bf16.mxu0 0
      %1416 = vmatpush1.bf16.msra.mxu0 %v1413
      %1417 = vmatprep.subr.bf16.mxu0 0
      %1418 = vmatpush1.bf16.msra.mxu0 0
      %1419 = vmatprep.subr.bf16.mxu0 0
      %1420 = vmatpush1.bf16.msra.mxu0 0
      %1421 = vmatprep.subr.bf16.mxu0 0
      %1422 = vmatpush1.bf16.msra.mxu0 0
      %1423 = vmatprep.subr.bf16.mxu0 0
      %1424 = vmatpush1.bf16.msra.mxu0 0
      %1425 = vmatprep.subr.bf16.mxu0 0
      %1426 = vmatpush1.bf16.msra.mxu0 0
      %1427 = vmatprep.subr.bf16.mxu0 0
      %1428 = vmatpush1.bf16.msra.mxu0 0
      %1429 = vmatprep.subr.bf16.mxu0 0
      %1430 = vmatpush1.bf16.msra.mxu0 0
      %1431 = vmatprep.subr.bf16.mxu0 0
      %1432 = vmatpush1.bf16.msra.mxu0 0
      %1433 = vmatprep.subr.bf16.mxu0 0
      %1434 = vmatpush1.bf16.msra.mxu0 0
      %1435 = vmatprep.subr.bf16.mxu0 0
      %1436 = vmatpush1.bf16.msra.mxu0 0
      %1437 = vmatprep.subr.bf16.mxu0 0
      %1438 = vmatpush1.bf16.msra.mxu0 0
      %1439 = vmatprep.subr.bf16.mxu0 0
      %1440 = vmatpush1.bf16.msra.mxu0 0
      %1441 = vmatprep.subr.bf16.mxu0 0
      %1442 = vmatpush1.bf16.msra.mxu0 0
      %1443 = vmatprep.subr.bf16.mxu0 0
      %1444 = vmatpush1.bf16.msra.mxu0 0
      %1445 = vmatprep.subr.bf16.mxu0 0
      %1446 = vmatpush1.bf16.msra.mxu0 0
      %1447 = vmatprep.mubr.bf16.mxu0 0
      %1448 = vmatmul.mubr.bf16.gmra.mrb[0].mxu0 %v1386
      %v1449 = vpop.f32.mrb[0].mxu0
      %v1450 = vadd.f32 0.0, %v1449
      %v1451 = vpop.f32.mrb[0].mxu0
      %v1452 = vpop.f32.mrb[0].mxu0
      %v1453 = vadd.f32 0.0, %v1452
      %v1454 = vpop.f32.mrb[0].mxu0
      %1455 = vmatprep.mubr.bf16.mxu0 0
      %1456 = vmatmul.mubr.bf16.gmra.mrb[0].mxu0 %v1389
      %v1457 = vpop.f32.mrb[0].mxu0
      %v1458 = vadd.f32 0.0, %v1457
      %v1459 = vpop.f32.mrb[0].mxu0
      %v1460 = vpop.f32.mrb[0].mxu0
      %v1461 = vadd.f32 0.0, %v1460
      %v1462 = vpop.f32.mrb[0].mxu0
      %1463 = vmatprep.mubr.bf16.mxu0 0
      %1464 = vmatmul.mubr.bf16.gmra.mrb[0].mxu0 %v1392
      %v1465 = vpop.f32.mrb[0].mxu0
      %v1466 = vadd.f32 0.0, %v1465
      %v1467 = vpop.f32.mrb[0].mxu0
      %v1468 = vpop.f32.mrb[0].mxu0
      %v1469 = vadd.f32 0.0, %v1468
      %v1470 = vpop.f32.mrb[0].mxu0
      %1471 = vmatprep.mubr.bf16.mxu0 0
      %1472 = vmatmul.mubr.bf16.gmra.mrb[0].mxu0 %v1395
      %v1473 = vpop.f32.mrb[0].mxu0
      %v1474 = vadd.f32 0.0, %v1473
      %v1475 = vpop.f32.mrb[0].mxu0
      %v1476 = vpop.f32.mrb[0].mxu0
      %v1477 = vadd.f32 0.0, %v1476
      %v1478 = vpop.f32.mrb[0].mxu0
      %1479 = vmatprep.mubr.bf16.mxu0 0
      %1480 = vmatmul.mubr.bf16.gmra.mrb[0].mxu0 %v1398
      %v1481 = vpop.f32.mrb[0].mxu0
      %v1482 = vadd.f32 0.0, %v1481
      %v1483 = vpop.f32.mrb[0].mxu0
      %v1484 = vpop.f32.mrb[0].mxu0
      %v1485 = vadd.f32 0.0, %v1484
      %v1486 = vpop.f32.mrb[0].mxu0
      %1487 = vmatprep.mubr.bf16.mxu0 0
      %1488 = vmatmul.mubr.bf16.gmra.mrb[0].mxu0 %v1401
      %v1489 = vpop.f32.mrb[0].mxu0
      %v1490 = vadd.f32 0.0, %v1489
      %v1491 = vpop.f32.mrb[0].mxu0
      %v1492 = vpop.f32.mrb[0].mxu0
      %v1493 = vadd.f32 0.0, %v1492
      %v1494 = vpop.f32.mrb[0].mxu0
      %1495 = vmatprep.mubr.bf16.mxu0 0
      %1496 = vmatmul.mubr.bf16.gmra.mrb[0].mxu0 %v1404
      %v1497 = vpop.f32.mrb[0].mxu0
      %v1498 = vadd.f32 0.0, %v1497
      %v1499 = vpop.f32.mrb[0].mxu0
      %v1500 = vpop.f32.mrb[0].mxu0
      %v1501 = vadd.f32 0.0, %v1500
      %v1502 = vpop.f32.mrb[0].mxu0
      %1503 = vmatprep.mubr.bf16.mxu0 0
      %1504 = vmatmul.mubr.bf16.gmra.mrb[0].mxu0 %v1407
      %v1505 = vpop.f32.mrb[0].mxu0
      %v1506 = vadd.f32 0.0, %v1505
      %v1507 = vpop.f32.mrb[0].mxu0
      %v1508 = vpop.f32.mrb[0].mxu0
      %v1509 = vadd.f32 0.0, %v1508
      %v1510 = vpop.f32.mrb[0].mxu0
      %1511 = vmatprep.mubr.bf16.mxu0 0
      %1512 = vmatmul.mubr.bf16.gmra.mrb[0].mxu0 %v1410
      %v1513 = vpop.f32.mrb[0].mxu0
      %v1514 = vadd.f32 0.0, %v1513
      %v1515 = vpop.f32.mrb[0].mxu0
      %v1516 = vpop.f32.mrb[0].mxu0
      %v1517 = vadd.f32 0.0, %v1516
      %v1518 = vpop.f32.mrb[0].mxu0
      %1519 = vdwg.mxu0
      %v1520 = vadd.f32 %v1341, %v1450
      %v1521 = vadd.f32 %v1342, %v1453
      %v1522 = vadd.f32 %v1343, %v1458
      %v1523 = vadd.f32 %v1344, %v1461
      %v1524 = vadd.f32 %v1345, %v1466
      %v1525 = vadd.f32 %v1346, %v1469
      %v1526 = vadd.f32 %v1347, %v1474
      %v1527 = vadd.f32 %v1348, %v1477
      %v1528 = vadd.f32 %v1349, %v1482
      %v1529 = vadd.f32 %v1350, %v1485
      %v1530 = vadd.f32 %v1351, %v1490
      %v1531 = vadd.f32 %v1352, %v1493
      %v1532 = vadd.f32 %v1353, %v1498
      %v1533 = vadd.f32 %v1354, %v1501
      %v1534 = vadd.f32 %v1355, %v1506
      %v1535 = vadd.f32 %v1356, %v1509
      %v1536 = vadd.f32 %v1357, %v1514
      %v1537 = vadd.f32 %v1358, %v1517
      %v1538 = vld [vmem:[%s270 + $0x10] sm:$0xc]
      %v1539 = vld [vmem:[%s270 + $0x14] sm:$0xf]
      %v1540 = vld [vmem:[%s270 + $0x18] sm:$0xf]
      %v1541 = vld [vmem:[%s270 + $0x1c] sm:$0xf]
      %v1542 = vld [vmem:[%s270 + $0x20] sm:$0xf]
      %v1543 = vld [vmem:[%s270 + $0x24] sm:$0xf]
      %v1544 = vld [vmem:[%s270 + $0x28] sm:$0xf]
      %v1545 = vld [vmem:[%s270 + $0x2c] sm:$0xf]
      %v1546 = vld [vmem:[%s270 + $0x30] sm:$0xf]
      %v1547 = vld [vmem:[%s270 + $0x34] sm:$0xf]
      %v1548 = vld [vmem:[%s270 + $0x38] sm:$0xf]
      %v1549 = vld [vmem:[%s270 + $0x3c] sm:$0xf]
      %v1550 = vld [vmem:[%s270 + $0x40] sm:$0xf]
      %v1551 = vld [vmem:[%s270 + $0x44] sm:$0xf]
      %v1552 = vld [vmem:[%s270 + $0x48] sm:$0xf]
      %v1553 = vld [vmem:[%s270 + $0x4c] sm:$0xf]
      %v1554 = vld [vmem:[%s270 + $0x50] sm:$0xf]
      %v1555 = vld [vmem:[%s270 + $0x54] sm:$0xf]
      %v1556 = vld [vmem:[%s270 + $0x58] sm:$0x3]
      %s1557 = scalar_lea.vmem %s1, 12
      %v1558 = vld [vmem:[%s1557] sm:$0x3]
      %v1578 = vunpack.c.l.b16 %v1538
      %v1579 = vunpack.c.l.b16 %v1539
      %v1580 = vunpack.c.l.b16 %v1540
      %v1581 = vunpack.c.l.b16 %v1541
      %v1582 = vunpack.c.l.b16 %v1542
      %v1583 = vunpack.c.l.b16 %v1543
      %v1584 = vunpack.c.l.b16 %v1544
      %v1585 = vunpack.c.l.b16 %v1545
      %v1586 = vunpack.c.l.b16 %v1546
      %v1587 = vunpack.c.l.b16 %v1547
      %v1588 = vunpack.c.l.b16 %v1548
      %v1589 = vunpack.c.l.b16 %v1549
      %v1590 = vunpack.c.l.b16 %v1550
      %v1591 = vunpack.c.l.b16 %v1551
      %v1592 = vunpack.c.l.b16 %v1552
      %v1593 = vunpack.c.l.b16 %v1553
      %v1594 = vunpack.c.l.b16 %v1554
      %v1595 = vunpack.c.l.b16 %v1555
      %v1596 = vunpack.c.l.b16 %v1556
      %v1597 = vpack.c.b16 %v1579, %v1578
      %v1598 = vpack.c.b16 %v1581, %v1580
      %v1599 = vpack.c.b16 %v1583, %v1582
      %v1600 = vpack.c.b16 %v1585, %v1584
      %v1601 = vpack.c.b16 %v1587, %v1586
      %v1602 = vpack.c.b16 %v1589, %v1588
      %v1603 = vpack.c.b16 %v1591, %v1590
      %v1604 = vpack.c.b16 %v1593, %v1592
      %v1605 = vpack.c.b16 %v1595, %v1594
      %v1606 = vpack.c.b16 %v1596, %v1596
      %v1607 = vrot.slane %v1597, 2
      %v1608 = vrot.slane %v1598, 2
      %v1609 = vsel %vm1365, %v1607, %v1608
      %v1610 = vrot.slane %v1599, 2
      %v1611 = vsel %vm1365, %v1608, %v1610
      %v1612 = vrot.slane %v1600, 2
      %v1613 = vsel %vm1365, %v1610, %v1612
      %v1614 = vrot.slane %v1601, 2
      %v1615 = vsel %vm1365, %v1612, %v1614
      %v1616 = vrot.slane %v1602, 2
      %v1617 = vsel %vm1365, %v1614, %v1616
      %v1618 = vrot.slane %v1603, 2
      %v1619 = vsel %vm1365, %v1616, %v1618
      %v1620 = vrot.slane %v1604, 2
      %v1621 = vsel %vm1365, %v1618, %v1620
      %v1622 = vrot.slane %v1605, 2
      %v1623 = vsel %vm1365, %v1620, %v1622
      %v1624 = vrot.slane %v1606, 2
      %v1625 = vsel %vm1365, %v1622, %v1624
      %v1627 = vsel %vm427, %v1609, 0
      %v1630 = vsel %vm427, %v1611, 0
      %v1633 = vsel %vm427, %v1613, 0
      %v1636 = vsel %vm427, %v1615, 0
      %v1639 = vsel %vm427, %v1617, 0
      %v1642 = vsel %vm427, %v1619, 0
      %v1645 = vsel %vm427, %v1621, 0
      %v1648 = vsel %vm427, %v1623, 0
      %v1651 = vsel %vm427, %v1625, 0
      %v1654 = vsel %vm455, %v1558, 0
      %1656 = vmatprep.subr.bf16.mxu0 0
      %1657 = vmatpush1.bf16.msra.mxu0 %v1654
      %1658 = vmatprep.subr.bf16.mxu0 0
      %1659 = vmatpush1.bf16.msra.mxu0 0
      %1660 = vmatprep.subr.bf16.mxu0 0
      %1661 = vmatpush1.bf16.msra.mxu0 0
      %1662 = vmatprep.subr.bf16.mxu0 0
      %1663 = vmatpush1.bf16.msra.mxu0 0
      %1664 = vmatprep.subr.bf16.mxu0 0
      %1665 = vmatpush1.bf16.msra.mxu0 0
      %1666 = vmatprep.subr.bf16.mxu0 0
      %1667 = vmatpush1.bf16.msra.mxu0 0
      %1668 = vmatprep.subr.bf16.mxu0 0
      %1669 = vmatpush1.bf16.msra.mxu0 0
      %1670 = vmatprep.subr.bf16.mxu0 0
      %1671 = vmatpush1.bf16.msra.mxu0 0
      %1672 = vmatprep.subr.bf16.mxu0 0
      %1673 = vmatpush1.bf16.msra.mxu0 0
      %1674 = vmatprep.subr.bf16.mxu0 0
      %1675 = vmatpush1.bf16.msra.mxu0 0
      %1676 = vmatprep.subr.bf16.mxu0 0
      %1677 = vmatpush1.bf16.msra.mxu0 0
      %1678 = vmatprep.subr.bf16.mxu0 0
      %1679 = vmatpush1.bf16.msra.mxu0 0
      %1680 = vmatprep.subr.bf16.mxu0 0
      %1681 = vmatpush1.bf16.msra.mxu0 0
      %1682 = vmatprep.subr.bf16.mxu0 0
      %1683 = vmatpush1.bf16.msra.mxu0 0
      %1684 = vmatprep.subr.bf16.mxu0 0
      %1685 = vmatpush1.bf16.msra.mxu0 0
      %1686 = vmatprep.subr.bf16.mxu0 0
      %1687 = vmatpush1.bf16.msra.mxu0 0
      %1688 = vmatprep.mubr.bf16.mxu0 0
      %1689 = vmatmul.mubr.bf16.gmra.mrb[0].mxu0 %v1627
      %v1690 = vpop.f32.mrb[0].mxu0
      %v1691 = vadd.f32 0.0, %v1690
      %v1692 = vpop.f32.mrb[0].mxu0
      %v1693 = vpop.f32.mrb[0].mxu0
      %v1694 = vadd.f32 0.0, %v1693
      %v1695 = vpop.f32.mrb[0].mxu0
      %1696 = vmatprep.mubr.bf16.mxu0 0
      %1697 = vmatmul.mubr.bf16.gmra.mrb[0].mxu0 %v1630
      %v1698 = vpop.f32.mrb[0].mxu0
      %v1699 = vadd.f32 0.0, %v1698
      %v1700 = vpop.f32.mrb[0].mxu0
      %v1701 = vpop.f32.mrb[0].mxu0
      %v1702 = vadd.f32 0.0, %v1701
      %v1703 = vpop.f32.mrb[0].mxu0
      %1704 = vmatprep.mubr.bf16.mxu0 0
      %1705 = vmatmul.mubr.bf16.gmra.mrb[0].mxu0 %v1633
      %v1706 = vpop.f32.mrb[0].mxu0
      %v1707 = vadd.f32 0.0, %v1706
      %v1708 = vpop.f32.mrb[0].mxu0
      %v1709 = vpop.f32.mrb[0].mxu0
      %v1710 = vadd.f32 0.0, %v1709
      %v1711 = vpop.f32.mrb[0].mxu0
      %1712 = vmatprep.mubr.bf16.mxu0 0
      %1713 = vmatmul.mubr.bf16.gmra.mrb[0].mxu0 %v1636
      %v1714 = vpop.f32.mrb[0].mxu0
      %v1715 = vadd.f32 0.0, %v1714
      %v1716 = vpop.f32.mrb[0].mxu0
      %v1717 = vpop.f32.mrb[0].mxu0
      %v1718 = vadd.f32 0.0, %v1717
      %v1719 = vpop.f32.mrb[0].mxu0
      %1720 = vmatprep.mubr.bf16.mxu0 0
      %1721 = vmatmul.mubr.bf16.gmra.mrb[0].mxu0 %v1639
      %v1722 = vpop.f32.mrb[0].mxu0
      %v1723 = vadd.f32 0.0, %v1722
      %v1724 = vpop.f32.mrb[0].mxu0
      %v1725 = vpop.f32.mrb[0].mxu0
      %v1726 = vadd.f32 0.0, %v1725
      %v1727 = vpop.f32.mrb[0].mxu0
      %1728 = vmatprep.mubr.bf16.mxu0 0
      %1729 = vmatmul.mubr.bf16.gmra.mrb[0].mxu0 %v1642
      %v1730 = vpop.f32.mrb[0].mxu0
      %v1731 = vadd.f32 0.0, %v1730
      %v1732 = vpop.f32.mrb[0].mxu0
      %v1733 = vpop.f32.mrb[0].mxu0
      %v1734 = vadd.f32 0.0, %v1733
      %v1735 = vpop.f32.mrb[0].mxu0
      %1736 = vmatprep.mubr.bf16.mxu0 0
      %1737 = vmatmul.mubr.bf16.gmra.mrb[0].mxu0 %v1645
      %v1738 = vpop.f32.mrb[0].mxu0
      %v1739 = vadd.f32 0.0, %v1738
      %v1740 = vpop.f32.mrb[0].mxu0
      %v1741 = vpop.f32.mrb[0].mxu0
      %v1742 = vadd.f32 0.0, %v1741
      %v1743 = vpop.f32.mrb[0].mxu0
      %1744 = vmatprep.mubr.bf16.mxu0 0
      %1745 = vmatmul.mubr.bf16.gmra.mrb[0].mxu0 %v1648
      %v1746 = vpop.f32.mrb[0].mxu0
      %v1747 = vadd.f32 0.0, %v1746
      %v1748 = vpop.f32.mrb[0].mxu0
      %v1749 = vpop.f32.mrb[0].mxu0
      %v1750 = vadd.f32 0.0, %v1749
      %v1751 = vpop.f32.mrb[0].mxu0
      %1752 = vmatprep.mubr.bf16.mxu0 0
      %1753 = vmatmul.mubr.bf16.gmra.mrb[0].mxu0 %v1651
      %v1754 = vpop.f32.mrb[0].mxu0
      %v1755 = vadd.f32 0.0, %v1754
      %v1756 = vpop.f32.mrb[0].mxu0
      %v1757 = vpop.f32.mrb[0].mxu0
      %v1758 = vadd.f32 0.0, %v1757
      %v1759 = vpop.f32.mrb[0].mxu0
      %1760 = vdwg.mxu0
      %v1761 = vadd.f32 %v1520, %v1691
      %v1762 = vadd.f32 %v1521, %v1694
      %v1763 = vadd.f32 %v1522, %v1699
      %v1764 = vadd.f32 %v1523, %v1702
      %v1765 = vadd.f32 %v1524, %v1707
      %v1766 = vadd.f32 %v1525, %v1710
      %v1767 = vadd.f32 %v1526, %v1715
      %v1768 = vadd.f32 %v1527, %v1718
      %v1769 = vadd.f32 %v1528, %v1723
      %v1770 = vadd.f32 %v1529, %v1726
      %v1771 = vadd.f32 %v1530, %v1731
      %v1772 = vadd.f32 %v1531, %v1734
      %v1773 = vadd.f32 %v1532, %v1739
      %v1774 = vadd.f32 %v1533, %v1742
      %v1775 = vadd.f32 %v1534, %v1747
      %v1776 = vadd.f32 %v1535, %v1750
      %v1777 = vadd.f32 %v1536, %v1755
      %v1778 = vadd.f32 %v1537, %v1758
      %v1779 = vld [vmem:[%s270 + $0x58] sm:$0x7]
      %s1780 = scalar_lea.vmem %s1, 14
      %v1781 = vld [vmem:[%s1780] sm:$0x3]
      %v1783 = vunpack.c.l.b16 %v1779
      %v1784 = vpack.c.b16 %v1783, %v1783
      %vm1785 = vsmask.f32 5376
      %v1787 = vshrl.u32 %v1597, 16
      %v1789 = vrot.slane %v1787, 2
      %v1790 = vshll.u32 %v1597, 16
      %v1792 = vrot.slane %v1790, 3
      %v1793 = vor.u32 %v1789, %v1792
      %v1795 = vshrl.u32 %v1598, 16
      %v1797 = vrot.slane %v1795, 2
      %v1798 = vshll.u32 %v1598, 16
      %v1800 = vrot.slane %v1798, 3
      %v1801 = vor.u32 %v1797, %v1800
      %v1802 = vsel %vm1785, %v1793, %v1801
      %v1804 = vshrl.u32 %v1599, 16
      %v1806 = vrot.slane %v1804, 2
      %v1807 = vshll.u32 %v1599, 16
      %v1809 = vrot.slane %v1807, 3
      %v1810 = vor.u32 %v1806, %v1809
      %v1811 = vsel %vm1785, %v1801, %v1810
      %v1813 = vshrl.u32 %v1600, 16
      %v1815 = vrot.slane %v1813, 2
      %v1816 = vshll.u32 %v1600, 16
      %v1818 = vrot.slane %v1816, 3
      %v1819 = vor.u32 %v1815, %v1818
      %v1820 = vsel %vm1785, %v1810, %v1819
      %v1822 = vshrl.u32 %v1601, 16
      %v1824 = vrot.slane %v1822, 2
      %v1825 = vshll.u32 %v1601, 16
      %v1827 = vrot.slane %v1825, 3
      %v1828 = vor.u32 %v1824, %v1827
      %v1829 = vsel %vm1785, %v1819, %v1828
      %v1831 = vshrl.u32 %v1602, 16
      %v1833 = vrot.slane %v1831, 2
      %v1834 = vshll.u32 %v1602, 16
      %v1836 = vrot.slane %v1834, 3
      %v1837 = vor.u32 %v1833, %v1836
      %v1838 = vsel %vm1785, %v1828, %v1837
      %v1840 = vshrl.u32 %v1603, 16
      %v1842 = vrot.slane %v1840, 2
      %v1843 = vshll.u32 %v1603, 16
      %v1845 = vrot.slane %v1843, 3
      %v1846 = vor.u32 %v1842, %v1845
      %v1847 = vsel %vm1785, %v1837, %v1846
      %v1849 = vshrl.u32 %v1604, 16
      %v1851 = vrot.slane %v1849, 2
      %v1852 = vshll.u32 %v1604, 16
      %v1854 = vrot.slane %v1852, 3
      %v1855 = vor.u32 %v1851, %v1854
      %v1856 = vsel %vm1785, %v1846, %v1855
      %v1858 = vshrl.u32 %v1605, 16
      %v1860 = vrot.slane %v1858, 2
      %v1861 = vshll.u32 %v1605, 16
      %v1863 = vrot.slane %v1861, 3
      %v1864 = vor.u32 %v1860, %v1863
      %v1865 = vsel %vm1785, %v1855, %v1864
      %v1867 = vshrl.u32 %v1784, 16
      %v1869 = vrot.slane %v1867, 2
      %v1870 = vshll.u32 %v1784, 16
      %v1872 = vrot.slane %v1870, 3
      %v1873 = vor.u32 %v1869, %v1872
      %v1874 = vsel %vm1785, %v1864, %v1873
      %v1876 = vsel %vm427, %v1802, 0
      %v1879 = vsel %vm427, %v1811, 0
      %v1882 = vsel %vm427, %v1820, 0
      %v1885 = vsel %vm427, %v1829, 0
      %v1888 = vsel %vm427, %v1838, 0
      %v1891 = vsel %vm427, %v1847, 0
      %v1894 = vsel %vm427, %v1856, 0
      %v1897 = vsel %vm427, %v1865, 0
      %v1900 = vsel %vm427, %v1874, 0
      %v1903 = vsel %vm455, %v1781, 0
      %1905 = vmatprep.subr.bf16.mxu0 0
      %1906 = vmatpush1.bf16.msra.mxu0 %v1903
      %1907 = vmatprep.subr.bf16.mxu0 0
      %1908 = vmatpush1.bf16.msra.mxu0 0
      %1909 = vmatprep.subr.bf16.mxu0 0
      %1910 = vmatpush1.bf16.msra.mxu0 0
      %1911 = vmatprep.subr.bf16.mxu0 0
      %1912 = vmatpush1.bf16.msra.mxu0 0
      %1913 = vmatprep.subr.bf16.mxu0 0
      %1914 = vmatpush1.bf16.msra.mxu0 0
      %1915 = vmatprep.subr.bf16.mxu0 0
      %1916 = vmatpush1.bf16.msra.mxu0 0
      %1917 = vmatprep.subr.bf16.mxu0 0
      %1918 = vmatpush1.bf16.msra.mxu0 0
      %1919 = vmatprep.subr.bf16.mxu0 0
      %1920 = vmatpush1.bf16.msra.mxu0 0
      %1921 = vmatprep.subr.bf16.mxu0 0
      %1922 = vmatpush1.bf16.msra.mxu0 0
      %1923 = vmatprep.subr.bf16.mxu0 0
      %1924 = vmatpush1.bf16.msra.mxu0 0
      %1925 = vmatprep.subr.bf16.mxu0 0
      %1926 = vmatpush1.bf16.msra.mxu0 0
      %1927 = vmatprep.subr.bf16.mxu0 0
      %1928 = vmatpush1.bf16.msra.mxu0 0
      %1929 = vmatprep.subr.bf16.mxu0 0
      %1930 = vmatpush1.bf16.msra.mxu0 0
      %1931 = vmatprep.subr.bf16.mxu0 0
      %1932 = vmatpush1.bf16.msra.mxu0 0
      %1933 = vmatprep.subr.bf16.mxu0 0
      %1934 = vmatpush1.bf16.msra.mxu0 0
      %1935 = vmatprep.subr.bf16.mxu0 0
      %1936 = vmatpush1.bf16.msra.mxu0 0
      %1937 = vmatprep.mubr.bf16.mxu0 0
      %1938 = vmatmul.mubr.bf16.gmra.mrb[0].mxu0 %v1876
      %v1939 = vpop.f32.mrb[0].mxu0
      %v1940 = vadd.f32 0.0, %v1939
      %v1941 = vpop.f32.mrb[0].mxu0
      %v1942 = vpop.f32.mrb[0].mxu0
      %v1943 = vadd.f32 0.0, %v1942
      %v1944 = vpop.f32.mrb[0].mxu0
      %1945 = vmatprep.mubr.bf16.mxu0 0
      %1946 = vmatmul.mubr.bf16.gmra.mrb[0].mxu0 %v1879
      %v1947 = vpop.f32.mrb[0].mxu0
      %v1948 = vadd.f32 0.0, %v1947
      %v1949 = vpop.f32.mrb[0].mxu0
      %v1950 = vpop.f32.mrb[0].mxu0
      %v1951 = vadd.f32 0.0, %v1950
      %v1952 = vpop.f32.mrb[0].mxu0
      %1953 = vmatprep.mubr.bf16.mxu0 0
      %1954 = vmatmul.mubr.bf16.gmra.mrb[0].mxu0 %v1882
      %v1955 = vpop.f32.mrb[0].mxu0
      %v1956 = vadd.f32 0.0, %v1955
      %v1957 = vpop.f32.mrb[0].mxu0
      %v1958 = vpop.f32.mrb[0].mxu0
      %v1959 = vadd.f32 0.0, %v1958
      %v1960 = vpop.f32.mrb[0].mxu0
      %1961 = vmatprep.mubr.bf16.mxu0 0
      %1962 = vmatmul.mubr.bf16.gmra.mrb[0].mxu0 %v1885
      %v1963 = vpop.f32.mrb[0].mxu0
      %v1964 = vadd.f32 0.0, %v1963
      %v1965 = vpop.f32.mrb[0].mxu0
      %v1966 = vpop.f32.mrb[0].mxu0
      %v1967 = vadd.f32 0.0, %v1966
      %v1968 = vpop.f32.mrb[0].mxu0
      %1969 = vmatprep.mubr.bf16.mxu0 0
      %1970 = vmatmul.mubr.bf16.gmra.mrb[0].mxu0 %v1888
      %v1971 = vpop.f32.mrb[0].mxu0
      %v1972 = vadd.f32 0.0, %v1971
      %v1973 = vpop.f32.mrb[0].mxu0
      %v1974 = vpop.f32.mrb[0].mxu0
      %v1975 = vadd.f32 0.0, %v1974
      %v1976 = vpop.f32.mrb[0].mxu0
      %1977 = vmatprep.mubr.bf16.mxu0 0
      %1978 = vmatmul.mubr.bf16.gmra.mrb[0].mxu0 %v1891
      %v1979 = vpop.f32.mrb[0].mxu0
      %v1980 = vadd.f32 0.0, %v1979
      %v1981 = vpop.f32.mrb[0].mxu0
      %v1982 = vpop.f32.mrb[0].mxu0
      %v1983 = vadd.f32 0.0, %v1982
      %v1984 = vpop.f32.mrb[0].mxu0
      %1985 = vmatprep.mubr.bf16.mxu0 0
      %1986 = vmatmul.mubr.bf16.gmra.mrb[0].mxu0 %v1894
      %v1987 = vpop.f32.mrb[0].mxu0
      %v1988 = vadd.f32 0.0, %v1987
      %v1989 = vpop.f32.mrb[0].mxu0
      %v1990 = vpop.f32.mrb[0].mxu0
      %v1991 = vadd.f32 0.0, %v1990
      %v1992 = vpop.f32.mrb[0].mxu0
      %1993 = vmatprep.mubr.bf16.mxu0 0
      %1994 = vmatmul.mubr.bf16.gmra.mrb[0].mxu0 %v1897
      %v1995 = vpop.f32.mrb[0].mxu0
      %v1996 = vadd.f32 0.0, %v1995
      %v1997 = vpop.f32.mrb[0].mxu0
      %v1998 = vpop.f32.mrb[0].mxu0
      %v1999 = vadd.f32 0.0, %v1998
      %v2000 = vpop.f32.mrb[0].mxu0
      %2001 = vmatprep.mubr.bf16.mxu0 0
      %2002 = vmatmul.mubr.bf16.gmra.mrb[0].mxu0 %v1900
      %v2003 = vpop.f32.mrb[0].mxu0
      %v2004 = vadd.f32 0.0, %v2003
      %v2005 = vpop.f32.mrb[0].mxu0
      %v2006 = vpop.f32.mrb[0].mxu0
      %v2007 = vadd.f32 0.0, %v2006
      %v2008 = vpop.f32.mrb[0].mxu0
      %2009 = vdwg.mxu0
      %v2010 = vadd.f32 %v1761, %v1940
      %v2011 = vadd.f32 %v1762, %v1943
      %v2012 = vadd.f32 %v1763, %v1948
      %v2013 = vadd.f32 %v1764, %v1951
      %v2014 = vadd.f32 %v1765, %v1956
      %v2015 = vadd.f32 %v1766, %v1959
      %v2016 = vadd.f32 %v1767, %v1964
      %v2017 = vadd.f32 %v1768, %v1967
      %v2018 = vadd.f32 %v1769, %v1972
      %v2019 = vadd.f32 %v1770, %v1975
      %v2020 = vadd.f32 %v1771, %v1980
      %v2021 = vadd.f32 %v1772, %v1983
      %v2022 = vadd.f32 %v1773, %v1988
      %v2023 = vadd.f32 %v1774, %v1991
      %v2024 = vadd.f32 %v1775, %v1996
      %v2025 = vadd.f32 %v1776, %v1999
      %v2026 = vadd.f32 %v1777, %v2004
      %v2027 = vadd.f32 %v1778, %v2007
      %v2028 = vld [vmem:[%s270 + $0x10] sm:$0x8]
      %s2029 = scalar_lea.vmem %s1, 16
      %v2030 = vld [vmem:[%s2029] sm:$0x3]
      %v2032 = vunpack.c.l.b16 %v2028
      %v2033 = vpack.c.b16 %v1579, %v2032
      %vm2034 = vcmask 1044480
      %v2035 = vrot.slane %v2033, 3
      %v2036 = vrot.slane %v1598, 3
      %v2037 = vsel %vm2034, %v2035, %v2036
      %v2038 = vrot.slane %v1599, 3
      %v2039 = vsel %vm2034, %v2036, %v2038
      %v2040 = vrot.slane %v1600, 3
      %v2041 = vsel %vm2034, %v2038, %v2040
      %v2042 = vrot.slane %v1601, 3
      %v2043 = vsel %vm2034, %v2040, %v2042
      %v2044 = vrot.slane %v1602, 3
      %v2045 = vsel %vm2034, %v2042, %v2044
      %v2046 = vrot.slane %v1603, 3
      %v2047 = vsel %vm2034, %v2044, %v2046
      %v2048 = vrot.slane %v1604, 3
      %v2049 = vsel %vm2034, %v2046, %v2048
      %v2050 = vrot.slane %v1605, 3
      %v2051 = vsel %vm2034, %v2048, %v2050
      %v2052 = vrot.slane %v1784, 3
      %v2053 = vsel %vm2034, %v2050, %v2052
      %v2055 = vsel %vm427, %v2037, 0
      %v2058 = vsel %vm427, %v2039, 0
      %v2061 = vsel %vm427, %v2041, 0
      %v2064 = vsel %vm427, %v2043, 0
      %v2067 = vsel %vm427, %v2045, 0
      %v2070 = vsel %vm427, %v2047, 0
      %v2073 = vsel %vm427, %v2049, 0
      %v2076 = vsel %vm427, %v2051, 0
      %v2079 = vsel %vm427, %v2053, 0
      %v2082 = vsel %vm455, %v2030, 0
      %2084 = vmatprep.subr.bf16.mxu0 0
      %2085 = vmatpush1.bf16.msra.mxu0 %v2082
      %2086 = vmatprep.subr.bf16.mxu0 0
      %2087 = vmatpush1.bf16.msra.mxu0 0
      %2088 = vmatprep.subr.bf16.mxu0 0
      %2089 = vmatpush1.bf16.msra.mxu0 0
      %2090 = vmatprep.subr.bf16.mxu0 0
      %2091 = vmatpush1.bf16.msra.mxu0 0
      %2092 = vmatprep.subr.bf16.mxu0 0
      %2093 = vmatpush1.bf16.msra.mxu0 0
      %2094 = vmatprep.subr.bf16.mxu0 0
      %2095 = vmatpush1.bf16.msra.mxu0 0
      %2096 = vmatprep.subr.bf16.mxu0 0
      %2097 = vmatpush1.bf16.msra.mxu0 0
      %2098 = vmatprep.subr.bf16.mxu0 0
      %2099 = vmatpush1.bf16.msra.mxu0 0
      %2100 = vmatprep.subr.bf16.mxu0 0
      %2101 = vmatpush1.bf16.msra.mxu0 0
      %2102 = vmatprep.subr.bf16.mxu0 0
      %2103 = vmatpush1.bf16.msra.mxu0 0
      %2104 = vmatprep.subr.bf16.mxu0 0
      %2105 = vmatpush1.bf16.msra.mxu0 0
      %2106 = vmatprep.subr.bf16.mxu0 0
      %2107 = vmatpush1.bf16.msra.mxu0 0
      %2108 = vmatprep.subr.bf16.mxu0 0
      %2109 = vmatpush1.bf16.msra.mxu0 0
      %2110 = vmatprep.subr.bf16.mxu0 0
      %2111 = vmatpush1.bf16.msra.mxu0 0
      %2112 = vmatprep.subr.bf16.mxu0 0
      %2113 = vmatpush1.bf16.msra.mxu0 0
      %2114 = vmatprep.subr.bf16.mxu0 0
      %2115 = vmatpush1.bf16.msra.mxu0 0
      %2116 = vmatprep.mubr.bf16.mxu0 0
      %2117 = vmatmul.mubr.bf16.gmra.mrb[0].mxu0 %v2055
      %v2118 = vpop.f32.mrb[0].mxu0
      %v2119 = vadd.f32 0.0, %v2118
      %v2120 = vpop.f32.mrb[0].mxu0
      %v2121 = vpop.f32.mrb[0].mxu0
      %v2122 = vadd.f32 0.0, %v2121
      %v2123 = vpop.f32.mrb[0].mxu0
      %2124 = vmatprep.mubr.bf16.mxu0 0
      %2125 = vmatmul.mubr.bf16.gmra.mrb[0].mxu0 %v2058
      %v2126 = vpop.f32.mrb[0].mxu0
      %v2127 = vadd.f32 0.0, %v2126
      %v2128 = vpop.f32.mrb[0].mxu0
      %v2129 = vpop.f32.mrb[0].mxu0
      %v2130 = vadd.f32 0.0, %v2129
      %v2131 = vpop.f32.mrb[0].mxu0
      %2132 = vmatprep.mubr.bf16.mxu0 0
      %2133 = vmatmul.mubr.bf16.gmra.mrb[0].mxu0 %v2061
      %v2134 = vpop.f32.mrb[0].mxu0
      %v2135 = vadd.f32 0.0, %v2134
      %v2136 = vpop.f32.mrb[0].mxu0
      %v2137 = vpop.f32.mrb[0].mxu0
      %v2138 = vadd.f32 0.0, %v2137
      %v2139 = vpop.f32.mrb[0].mxu0
      %2140 = vmatprep.mubr.bf16.mxu0 0
      %2141 = vmatmul.mubr.bf16.gmra.mrb[0].mxu0 %v2064
      %v2142 = vpop.f32.mrb[0].mxu0
      %v2143 = vadd.f32 0.0, %v2142
      %v2144 = vpop.f32.mrb[0].mxu0
      %v2145 = vpop.f32.mrb[0].mxu0
      %v2146 = vadd.f32 0.0, %v2145
      %v2147 = vpop.f32.mrb[0].mxu0
      %2148 = vmatprep.mubr.bf16.mxu0 0
      %2149 = vmatmul.mubr.bf16.gmra.mrb[0].mxu0 %v2067
      %v2150 = vpop.f32.mrb[0].mxu0
      %v2151 = vadd.f32 0.0, %v2150
      %v2152 = vpop.f32.mrb[0].mxu0
      %v2153 = vpop.f32.mrb[0].mxu0
      %v2154 = vadd.f32 0.0, %v2153
      %v2155 = vpop.f32.mrb[0].mxu0
      %2156 = vmatprep.mubr.bf16.mxu0 0
      %2157 = vmatmul.mubr.bf16.gmra.mrb[0].mxu0 %v2070
      %v2158 = vpop.f32.mrb[0].mxu0
      %v2159 = vadd.f32 0.0, %v2158
      %v2160 = vpop.f32.mrb[0].mxu0
      %v2161 = vpop.f32.mrb[0].mxu0
      %v2162 = vadd.f32 0.0, %v2161
      %v2163 = vpop.f32.mrb[0].mxu0
      %2164 = vmatprep.mubr.bf16.mxu0 0
      %2165 = vmatmul.mubr.bf16.gmra.mrb[0].mxu0 %v2073
      %v2166 = vpop.f32.mrb[0].mxu0
      %v2167 = vadd.f32 0.0, %v2166
      %v2168 = vpop.f32.mrb[0].mxu0
      %v2169 = vpop.f32.mrb[0].mxu0
      %v2170 = vadd.f32 0.0, %v2169
      %v2171 = vpop.f32.mrb[0].mxu0
      %2172 = vmatprep.mubr.bf16.mxu0 0
      %2173 = vmatmul.mubr.bf16.gmra.mrb[0].mxu0 %v2076
      %v2174 = vpop.f32.mrb[0].mxu0
      %v2175 = vadd.f32 0.0, %v2174
      %v2176 = vpop.f32.mrb[0].mxu0
      %v2177 = vpop.f32.mrb[0].mxu0
      %v2178 = vadd.f32 0.0, %v2177
      %v2179 = vpop.f32.mrb[0].mxu0
      %2180 = vmatprep.mubr.bf16.mxu0 0
      %2181 = vmatmul.mubr.bf16.gmra.mrb[0].mxu0 %v2079
      %v2182 = vpop.f32.mrb[0].mxu0
      %v2183 = vadd.f32 0.0, %v2182
      %v2184 = vpop.f32.mrb[0].mxu0
      %v2185 = vpop.f32.mrb[0].mxu0
      %v2186 = vadd.f32 0.0, %v2185
      %v2187 = vpop.f32.mrb[0].mxu0
      %2188 = vdwg.mxu0
      %v2189 = vadd.f32 %v2010, %v2119
      %v2190 = vadd.f32 %v2011, %v2122
      %v2191 = vadd.f32 %v2012, %v2127
      %v2192 = vadd.f32 %v2013, %v2130
      %v2193 = vadd.f32 %v2014, %v2135
      %v2194 = vadd.f32 %v2015, %v2138
      %v2195 = vadd.f32 %v2016, %v2143
      %v2196 = vadd.f32 %v2017, %v2146
      %v2197 = vadd.f32 %v2018, %v2151
      %v2198 = vadd.f32 %v2019, %v2154
      %v2199 = vadd.f32 %v2020, %v2159
      %v2200 = vadd.f32 %v2021, %v2162
      %v2201 = vadd.f32 %v2022, %v2167
      %v2202 = vadd.f32 %v2023, %v2170
      %v2203 = vadd.f32 %v2024, %v2175
      %v2204 = vadd.f32 %v2025, %v2178
      %v2205 = vadd.f32 %v2026, %v2183
      %v2206 = vadd.f32 %v2027, %v2186
      %v2207 = vld [vmem:[%s2] sm:$0x1]
      %v2209 = vlaneseq
      %v2210 = vshrl.u32 %v2209, 7
      %v2211 = vsub.s32 0, %v2210
      %v2212 = vrot.slane %v2207, %v2211
      %v2214 = vadd.f32 %v2189, %v2212
      %v2215 = vadd.f32 %v2190, %v2212
      %v2216 = vadd.f32 %v2191, %v2212
      %v2217 = vadd.f32 %v2192, %v2212
      %v2218 = vadd.f32 %v2193, %v2212
      %v2219 = vadd.f32 %v2194, %v2212
      %v2220 = vadd.f32 %v2195, %v2212
      %v2221 = vadd.f32 %v2196, %v2212
      %v2222 = vadd.f32 %v2197, %v2212
      %v2223 = vadd.f32 %v2198, %v2212
      %v2224 = vadd.f32 %v2199, %v2212
      %v2225 = vadd.f32 %v2200, %v2212
      %v2226 = vadd.f32 %v2201, %v2212
      %v2227 = vadd.f32 %v2202, %v2212
      %v2228 = vadd.f32 %v2203, %v2212
      %v2229 = vadd.f32 %v2204, %v2212
      %v2230 = vadd.f32 %v2205, %v2212
      %v2231 = vadd.f32 %v2206, %v2212
      %v2232 = vmax.f32 %v2214, 0.0
      %v2233 = vmax.f32 %v2215, 0.0
      %v2234 = vmax.f32 %v2216, 0.0
      %v2235 = vmax.f32 %v2217, 0.0
      %v2236 = vmax.f32 %v2218, 0.0
      %v2237 = vmax.f32 %v2219, 0.0
      %v2238 = vmax.f32 %v2220, 0.0
      %v2239 = vmax.f32 %v2221, 0.0
      %v2240 = vmax.f32 %v2222, 0.0
      %v2241 = vmax.f32 %v2223, 0.0
      %v2242 = vmax.f32 %v2224, 0.0
      %v2243 = vmax.f32 %v2225, 0.0
      %v2244 = vmax.f32 %v2226, 0.0
      %v2245 = vmax.f32 %v2227, 0.0
      %v2246 = vmax.f32 %v2228, 0.0
      %v2247 = vmax.f32 %v2229, 0.0
      %v2248 = vmax.f32 %v2230, 0.0
      %v2249 = vmax.f32 %v2231, 0.0
      %v2250 = vld [vmem:[%s3] sm:$0xff]
      %v2251 = vld [vmem:[%s3 + $0x8] sm:$0xff]
      %v2252 = vld [vmem:[%s3 + $0x10] sm:$0xff]
      %v2253 = vld [vmem:[%s3 + $0x18] sm:$0xff]
      %v2254 = vld [vmem:[%s3 + $0x20] sm:$0xff]
      %v2255 = vld [vmem:[%s3 + $0x28] sm:$0xff]
      %v2256 = vld [vmem:[%s3 + $0x30] sm:$0xff]
      %v2257 = vld [vmem:[%s3 + $0x38] sm:$0xff]
      %v2258 = vld [vmem:[%s3 + $0x40] sm:$0xff]
      %v2259 = vld [vmem:[%s3 + $0x48] sm:$0xff]
      %v2260 = vld [vmem:[%s3 + $0x50] sm:$0xff]
      %v2261 = vld [vmem:[%s3 + $0x58] sm:$0xff]
      %v2262 = vld [vmem:[%s3 + $0x60] sm:$0xff]
      %v2263 = vld [vmem:[%s3 + $0x68] sm:$0xff]
      %v2264 = vld [vmem:[%s3 + $0x70] sm:$0xff]
      %v2265 = vld [vmem:[%s3 + $0x78] sm:$0xff]
      %v2266 = vld [vmem:[%s3 + $0x80] sm:$0xff]
      %v2267 = vld [vmem:[%s3 + $0x88] sm:$0xff]
      %2269 = vset.pattern.permute.xlu0 0
      %2270 = vperm.xlu0 %2269, %v2250
      %v2271 = vpop.permute.xlu0 %2270
      %2274 = vset.pattern.permute.xlu0 0
      %2275 = vperm.xlu0 %2274, %v2251
      %v2276 = vpop.permute.xlu0 %2275
      %2279 = vset.pattern.permute.xlu0 0
      %2280 = vperm.xlu0 %2279, %v2252
      %v2281 = vpop.permute.xlu0 %2280
      %2284 = vset.pattern.permute.xlu0 0
      %2285 = vperm.xlu0 %2284, %v2253
      %v2286 = vpop.permute.xlu0 %2285
      %2289 = vset.pattern.permute.xlu0 0
      %2290 = vperm.xlu0 %2289, %v2254
      %v2291 = vpop.permute.xlu0 %2290
      %2294 = vset.pattern.permute.xlu0 0
      %2295 = vperm.xlu0 %2294, %v2255
      %v2296 = vpop.permute.xlu0 %2295
      %2299 = vset.pattern.permute.xlu0 0
      %2300 = vperm.xlu0 %2299, %v2256
      %v2301 = vpop.permute.xlu0 %2300
      %2304 = vset.pattern.permute.xlu0 0
      %2305 = vperm.xlu0 %2304, %v2257
      %v2306 = vpop.permute.xlu0 %2305
      %2309 = vset.pattern.permute.xlu0 0
      %2310 = vperm.xlu0 %2309, %v2258
      %v2311 = vpop.permute.xlu0 %2310
      %2314 = vset.pattern.permute.xlu0 0
      %2315 = vperm.xlu0 %2314, %v2259
      %v2316 = vpop.permute.xlu0 %2315
      %2319 = vset.pattern.permute.xlu0 0
      %2320 = vperm.xlu0 %2319, %v2260
      %v2321 = vpop.permute.xlu0 %2320
      %2324 = vset.pattern.permute.xlu0 0
      %2325 = vperm.xlu0 %2324, %v2261
      %v2326 = vpop.permute.xlu0 %2325
      %2329 = vset.pattern.permute.xlu0 0
      %2330 = vperm.xlu0 %2329, %v2262
      %v2331 = vpop.permute.xlu0 %2330
      %2334 = vset.pattern.permute.xlu0 0
      %2335 = vperm.xlu0 %2334, %v2263
      %v2336 = vpop.permute.xlu0 %2335
      %2339 = vset.pattern.permute.xlu0 0
      %2340 = vperm.xlu0 %2339, %v2264
      %v2341 = vpop.permute.xlu0 %2340
      %2344 = vset.pattern.permute.xlu0 0
      %2345 = vperm.xlu0 %2344, %v2265
      %v2346 = vpop.permute.xlu0 %2345
      %2349 = vset.pattern.permute.xlu0 0
      %2350 = vperm.xlu0 %2349, %v2266
      %v2351 = vpop.permute.xlu0 %2350
      %2354 = vset.pattern.permute.xlu0 0
      %2355 = vperm.xlu0 %2354, %v2267
      %v2356 = vpop.permute.xlu0 %2355
      %v2358 = vmul.f32 %v2232, %v2271
      %v2359 = vmul.f32 %v2233, %v2276
      %v2360 = vmul.f32 %v2234, %v2281
      %v2361 = vmul.f32 %v2235, %v2286
      %v2362 = vmul.f32 %v2236, %v2291
      %v2363 = vmul.f32 %v2237, %v2296
      %v2364 = vmul.f32 %v2238, %v2301
      %v2365 = vmul.f32 %v2239, %v2306
      %v2366 = vmul.f32 %v2240, %v2311
      %v2367 = vmul.f32 %v2241, %v2316
      %v2368 = vmul.f32 %v2242, %v2321
      %v2369 = vmul.f32 %v2243, %v2326
      %v2370 = vmul.f32 %v2244, %v2331
      %v2371 = vmul.f32 %v2245, %v2336
      %v2372 = vmul.f32 %v2246, %v2341
      %v2373 = vmul.f32 %v2247, %v2346
      %v2374 = vmul.f32 %v2248, %v2351
      %v2375 = vmul.f32 %v2249, %v2356
      %v2376 = vld [vmem:[#allocation2] sm:$0x1]
      %v2377 = vadd.f32 %v2358, %v2359
      %v2378 = vadd.f32 %v2377, %v2360
      %v2379 = vadd.f32 %v2378, %v2361
      %v2380 = vadd.f32 %v2379, %v2362
      %v2381 = vadd.f32 %v2380, %v2363
      %v2382 = vadd.f32 %v2381, %v2364
      %v2383 = vadd.f32 %v2382, %v2365
      %v2384 = vadd.f32 %v2383, %v2366
      %v2385 = vadd.f32 %v2384, %v2367
      %v2386 = vadd.f32 %v2385, %v2368
      %v2387 = vadd.f32 %v2386, %v2369
      %v2388 = vadd.f32 %v2387, %v2370
      %v2389 = vadd.f32 %v2388, %v2371
      %v2390 = vadd.f32 %v2389, %v2372
      %v2391 = vadd.f32 %v2390, %v2373
      %v2392 = vadd.f32 %v2391, %v2374
      %v2393 = vadd.f32 %v2392, %v2375
      %v2394 = vrot.slane %v2393, 4
      %v2395 = vadd.f32 %v2393, %v2394
      %v2396 = vrot.slane %v2395, 2
      %v2397 = vadd.f32 %v2395, %v2396
      %v2398 = vrot.slane %v2397, 1
      %v2399 = vadd.f32 %v2397, %v2398
      %v2400 = vadd.f32 %v2376, %v2399
      %2401 = vst [vmem:[#allocation2] sm:$0x1] %v2400
      %p2402 = scmp.eq.s32.totalorder %s22, 1
      // Predicated region
      $region49: #{normal_nn_forward.1} parent=43 // pred_check
        %p2403 = pneg %p2402
      $region50: #{normal_nn_forward.1} parent=43 // pred_check_branch
        %2405 = sbr.rel (%p2403) target = $region52
      $region51: #{normal_nn_forward.1} parent=43 // pred_region
        %v2406 = vld [vmem:[#allocation2] sm:$0x1]
        %v2407 = vmul.f32 %v2406, 0.00390625
        %v2408 = vpack.c.bf16 %v2407, %v2407
        %v2409 = vld [vmem:[%s4] sm:$0xf]
        %v2410 = vld [vmem:[%s4 + $0x4] sm:$0xf]
        %v2411 = vld [vmem:[%s4 + $0x8] sm:$0xf]
        %v2412 = vld [vmem:[%s4 + $0xc] sm:$0xf]
        %v2413 = vld [vmem:[%s4 + $0x10] sm:$0xf]
        %v2414 = vld [vmem:[%s4 + $0x14] sm:$0xf]
        %v2415 = vld [vmem:[%s4 + $0x18] sm:$0xf]
        %v2416 = vld [vmem:[%s4 + $0x1c] sm:$0xf]
        %v2417 = vld [vmem:[%s4 + $0x20] sm:$0xf]
        %v2418 = vld [vmem:[%s4 + $0x24] sm:$0xf]
        %v2419 = vld [vmem:[%s4 + $0x28] sm:$0xf]
        %v2420 = vld [vmem:[%s4 + $0x2c] sm:$0xf]
        %v2421 = vld [vmem:[%s4 + $0x30] sm:$0xf]
        %v2422 = vld [vmem:[%s4 + $0x34] sm:$0xf]
        %v2423 = vld [vmem:[%s4 + $0x38] sm:$0xf]
        %v2424 = vld [vmem:[%s4 + $0x3c] sm:$0xf]
        %v2425 = vld [vmem:[%s5] sm:$0x1]
        %v2442 = vunpack.c.l.b16 %v2409
        %v2443 = vunpack.c.l.b16 %v2410
        %v2444 = vunpack.c.l.b16 %v2411
        %v2445 = vunpack.c.l.b16 %v2412
        %v2446 = vunpack.c.l.b16 %v2413
        %v2447 = vunpack.c.l.b16 %v2414
        %v2448 = vunpack.c.l.b16 %v2415
        %v2449 = vunpack.c.l.b16 %v2416
        %v2450 = vunpack.c.l.b16 %v2417
        %v2451 = vunpack.c.l.b16 %v2418
        %v2452 = vunpack.c.l.b16 %v2419
        %v2453 = vunpack.c.l.b16 %v2420
        %v2454 = vunpack.c.l.b16 %v2421
        %v2455 = vunpack.c.l.b16 %v2422
        %v2456 = vunpack.c.l.b16 %v2423
        %v2457 = vunpack.c.l.b16 %v2424
        %v2458 = vpack.c.b16 %v2443, %v2442
        %v2459 = vpack.c.b16 %v2445, %v2444
        %v2460 = vpack.c.b16 %v2447, %v2446
        %v2461 = vpack.c.b16 %v2449, %v2448
        %v2462 = vpack.c.b16 %v2451, %v2450
        %v2463 = vpack.c.b16 %v2453, %v2452
        %v2464 = vpack.c.b16 %v2455, %v2454
        %v2465 = vpack.c.b16 %v2457, %v2456
        %2474 = vmatprep.subr.bf16.mxu0 0
        %2475 = vmatpush1.bf16.msra.mxu0 %v2458
        %2476 = vmatprep.subr.bf16.mxu0 0
        %2477 = vmatpush1.bf16.msra.mxu0 %v2459
        %2478 = vmatprep.subr.bf16.mxu0 0
        %2479 = vmatpush1.bf16.msra.mxu0 %v2460
        %2480 = vmatprep.subr.bf16.mxu0 0
        %2481 = vmatpush1.bf16.msra.mxu0 %v2461
        %2482 = vmatprep.subr.bf16.mxu0 0
        %2483 = vmatpush1.bf16.msra.mxu0 %v2462
        %2484 = vmatprep.subr.bf16.mxu0 0
        %2485 = vmatpush1.bf16.msra.mxu0 %v2463
        %2486 = vmatprep.subr.bf16.mxu0 0
        %2487 = vmatpush1.bf16.msra.mxu0 %v2464
        %2488 = vmatprep.subr.bf16.mxu0 0
        %2489 = vmatpush1.bf16.msra.mxu0 %v2465
        %2490 = vmatprep.subr.bf16.mxu0 0
        %2491 = vmatpush1.bf16.msra.mxu0 0
        %2492 = vmatprep.subr.bf16.mxu0 0
        %2493 = vmatpush1.bf16.msra.mxu0 0
        %2494 = vmatprep.subr.bf16.mxu0 0
        %2495 = vmatpush1.bf16.msra.mxu0 0
        %2496 = vmatprep.subr.bf16.mxu0 0
        %2497 = vmatpush1.bf16.msra.mxu0 0
        %2498 = vmatprep.subr.bf16.mxu0 0
        %2499 = vmatpush1.bf16.msra.mxu0 0
        %2500 = vmatprep.subr.bf16.mxu0 0
        %2501 = vmatpush1.bf16.msra.mxu0 0
        %2502 = vmatprep.subr.bf16.mxu0 0
        %2503 = vmatpush1.bf16.msra.mxu0 0
        %2504 = vmatprep.subr.bf16.mxu0 0
        %2505 = vmatpush1.bf16.msra.mxu0 0
        %2506 = vmatprep.mubr.bf16.mxu0 0
        %2507 = vmatmul.mubr.bf16.gmra.mrb[0].mxu0 %v2408
        %v2508 = vpop.f32.mrb[0].mxu0
        %v2509 = vadd.f32 %v2425, %v2508
        %v2510 = vpop.f32.mrb[0].mxu0
        %v2511 = vpop.f32.mrb[0].mxu0
        %v2512 = vpop.f32.mrb[0].mxu0
        %2513 = vdwg.mxu0
        %2514 = vst [vmem:[%s273] sm:$0x1] %v2509
      $region52: #{normal_nn_forward.1} parent=43 // pred_fallthru
        _
      %p2515 = scmp.lt.s32.totalorder %s21, 1
      %s2516 = scalar_select %p2515, %s21, 1
      %s2517 = scalar_lea.vmem %s6, %s2516
      // Predicated region
      $region53: #{normal_nn_forward.1} parent=43 // pred_check
        %p2518 = pneg %p180
      $region54: #{normal_nn_forward.1} parent=43 // pred_check_branch
        %2520 = sbr.rel (%p2518) target = $region56
      $region55: #{normal_nn_forward.1} parent=43 // pred_region
        _
      $region56: #{normal_nn_forward.1} parent=43 // pred_fallthru
        _
    $region44: #{normal_nn_forward.1} parent=5 // pred_fallthru
      _
    %p2521 = scmp.le.s32.totalorder 2, %s12
    // Predicated region
    $region57: #{normal_nn_forward.1} parent=5 // pred_check
      %p2522 = pneg %p2521
    $region58: #{normal_nn_forward.1} parent=5 // pred_check_branch
      %2524 = sbr.rel (%p2522) target = $region60
    $region59: #{normal_nn_forward.1} parent=5 // pred_region
      %s2525 = ssub.s32 %s12, 2
      // Predicated region
      $region61: #{normal_nn_forward.1} parent=59 // pred_check
        %p2526 = pneg %p186
      $region62: #{normal_nn_forward.1} parent=59 // pred_check_branch
        %2528 = sbr.rel (%p2526) target = $region64
      $region63: #{normal_nn_forward.1} parent=59 // pred_region
        %p2529 = scmp.lt.s32.totalorder %s23, 1
        %s2530 = scalar_select %p2529, %s23, 1
        %s2531 = scalar_lea.vmem %s6, %s2530
      $region64: #{normal_nn_forward.1} parent=59 // pred_fallthru
        _
    $region60: #{normal_nn_forward.1} parent=5 // pred_fallthru
      _
  $region6: #{normal_nn_forward.1} parent=0 // loop_footer
    %s16 = sadd.s32 1, %s12
  $region7: #{normal_nn_forward.1} parent=0 // loop_footer_branch
    %11 = sbr.rel target = $region3
  $region8: #{normal_nn_forward.1} parent=0 // loop_exit
    _

</llo_original>
